<compile_context>
chip_gen: v7x
topology: tpu7x:2x2x1
jax: 0.10.0
libtpu: 0.0.40
codegen_flags: <defaults>
</compile_context>

<pallas_src>
import functools

import jax
import jax.numpy as jnp
from jax import lax
from jax.experimental import pallas as pl
from jax.experimental.pallas import tpu as pltpu


def _ffn_ln_kernel(x_ref, w1_ref, b1_ref, w2_ref, b2_ref, g_ref, bta_ref, o_ref,
                   *, eps, inv_d):
    # x_ref: (tm, d_e) tile of rows (native dtype -> native-dtype MXU matmul).
    # Weights / biases / LN params are full resident VMEM operands.
    x = x_ref[...]

    # Conv1d(d_e -> d_h, k=1)  ==  x @ W1 + b1   (f32 accumulation on the MXU)
    h = jnp.dot(x, w1_ref[...], preferred_element_type=jnp.float32)
    h = jnp.maximum(h + b1_ref[...].astype(jnp.float32), 0.0)  # ReLU

    # Conv1d(d_h -> d_e, k=1)  ==  h @ W2 + b2
    # TODO(synk): for very large d_h (tm*d_h*4 >> a few MiB), chunk d_h with an
    # inner lax.fori_loop(unroll=True) so the (tm, d_h) intermediate never
    # materializes in full.
    y = jnp.dot(h.astype(w2_ref.dtype), w2_ref[...],
                preferred_element_type=jnp.float32)
    y = y + b2_ref[...].astype(jnp.float32)

    # Residual + LayerNorm over the last dim (d_e), fused single-pass stats.
    z = x.astype(jnp.float32) + y
    s1 = jnp.sum(z, axis=-1, keepdims=True)
    s2 = jnp.sum(z * z, axis=-1, keepdims=True)
    mean = s1 * inv_d
    var = jnp.maximum(s2 * inv_d - mean * mean, 0.0)
    zn = (z - mean) * lax.rsqrt(var + eps)
    o_ref[...] = (zn * g_ref[...].astype(jnp.float32)
                  + bta_ref[...].astype(jnp.float32)).astype(o_ref.dtype)


def _choose_tm(rows, d_e, d_h, act_itemsize, vmem_budget_bytes=24 * 2**20):
    """Pick a row tile sized against a v7x-safe VMEM budget."""
    # Per-row VMEM cost: double-buffered in+out tiles (2 bufs each) in the
    # activation dtype, plus ~f32 intermediates (h, y/z, stats) kept live.
    per_row = 4 * d_e * act_itemsize + 3 * d_h * 4 + 2 * d_e * 4
    tm = max(8, vmem_budget_bytes // per_row)
    tm = min(tm, 512)                    # pipeline overhead amortized past ~512
    tm = min(tm, max(rows // 2, 8))      # keep >= 2 grid steps (v7x: 2 TCs)
    if tm >= 256:
        tm = (tm // 256) * 256           # MXU-dim multiple (v6e/v7x)
    elif tm >= 128:
        tm = (tm // 128) * 128           # MXU-dim multiple (v5e)
    else:
        tm = (tm // 8) * 8               # sublane multiple
    return max(8, int(tm))


def posi_feed_forward(x, w1, b1, w2, b2, gamma, beta, *, eps=1e-5, tm=None):
    """x: (B, S, d_e).  Returns (B, S, d_e).

    w1: (d_e, d_h), w2: (d_h, d_e) -- math-friendly transposes of the PyTorch
    Conv1d (out_ch, in_ch, 1) weights.  Pass bf16 x/w1/w2 for bf16 MXU matmuls
    (accumulation and LayerNorm stay in f32).
    """
    B, S, d_e = x.shape
    d_h = w1.shape[1]
    assert d_e % 128 == 0 and d_h % 128 == 0, (
        "d_e and d_h must be multiples of 128 (pad features externally) so "
        "VPU lanes and vst writebacks stay dense")

    rows = B * S
    act_itemsize = x.dtype.itemsize
    w_itemsize = w1.dtype.itemsize
    if tm is None:
        tm = _choose_tm(rows, d_e, d_h, act_itemsize)
    rows_p = pl.cdiv(rows, tm) * tm

    x2 = x.reshape(rows, d_e)
    if rows_p != rows:
        # Row padding only: rows are independent, padded rows are sliced off.
        x2 = jnp.pad(x2, ((0, rows_p - rows), (0, 0)))

    b1_2 = b1.reshape(1, d_h).astype(jnp.float32)
    b2_2 = b2.reshape(1, d_e).astype(jnp.float32)
    g2 = gamma.reshape(1, d_e).astype(jnp.float32)
    bt2 = beta.reshape(1, d_e).astype(jnp.float32)

    # Explicit scoped-VMEM limit (sized for v7x's 64 MiB/TC; >= default 32 MiB).
    vmem_estimate = (
        4 * tm * d_e * act_itemsize              # double-buffered in/out tiles
        + 2 * d_e * d_h * w_itemsize             # resident weights (1 buffer)
        + (d_h + 3 * d_e) * 4                    # biases + LN params
        + 4 * tm * d_h * 4                       # f32 intermediates (h, ...)
        + 4 * tm * d_e * 4                       # f32 intermediates (y, z, stats)
    )
    vmem_limit_bytes = int(min(max(4 * vmem_estimate, 32 * 2**20), 64 * 2**20))

    flops = 2 * 2 * rows_p * d_e * d_h           # two matmuls
    bytes_accessed = (2 * rows_p * d_e * act_itemsize
                      + 2 * d_e * d_h * w_itemsize
                      + (d_h + 3 * d_e) * 4)
    cost = pl.CostEstimate(flops=int(flops), transcendentals=int(rows_p),
                           bytes_accessed=int(bytes_accessed))

    # Weights / params: whole-array, single-buffered, resident in VMEM
    # (constant across the grid -> no per-step DMA, no double buffering).
    resident = pl.BlockSpec(memory_space=pltpu.MemorySpace.VMEM)

    out = pl.pallas_call(
        functools.partial(_ffn_ln_kernel, eps=eps, inv_d=1.0 / d_e),
        out_shape=jax.ShapeDtypeStruct((rows_p, d_e), x.dtype),
        grid=(rows_p // tm,),
        in_specs=[
            pl.BlockSpec((tm, d_e), lambda i: (i, 0)),   # x row tile (pipelined)
            resident,                                    # W1
            resident,                                    # b1
            resident,                                    # W2
            resident,                                    # b2
            resident,                                    # gamma
            resident,                                    # beta
        ],
        out_specs=pl.BlockSpec((tm, d_e), lambda i: (i, 0)),
        compiler_params=pltpu.CompilerParams(
            dimension_semantics=("parallel",),
            vmem_limit_bytes=vmem_limit_bytes),
        cost_estimate=cost,
    )(x2, w1, b1_2, w2, b2_2, g2, bt2)

    return out[:rows].reshape(B, S, d_e)


if __name__ == "__main__":
    # Small but lane-dense config: d_e/d_h multiples of 128, B*S rows give a
    # grid of >= 2 steps with the auto-chosen tile (tm=256 here).
    B, S, d_e, d_h = 4, 128, 128, 256

    key = jax.random.PRNGKey(0)
    kx, k1, k2, k3, k4 = jax.random.split(key, 5)

    x = jax.random.normal(kx, (B, S, d_e), dtype=jnp.float32)

    # PyTorch stores Conv1d weights as (out_ch, in_ch, 1); we keep the math-
    # friendly transposed layouts so the kernel does plain x @ W.
    w1 = jax.random.normal(k1, (d_e, d_h), dtype=jnp.float32) * (1.0 / jnp.sqrt(d_e))
    b1 = jax.random.normal(k2, (d_h,), dtype=jnp.float32) * 0.01
    w2 = jax.random.normal(k3, (d_h, d_e), dtype=jnp.float32) * (1.0 / jnp.sqrt(d_h))
    b2 = jax.random.normal(k4, (d_e,), dtype=jnp.float32) * 0.01
    gamma = jnp.ones((d_e,), dtype=jnp.float32)
    beta = jnp.zeros((d_e,), dtype=jnp.float32)

    out = posi_feed_forward(x, w1, b1, w2, b2, gamma, beta)
    out = jax.block_until_ready(out)

    # Pure-JAX reference for correctness.
    h_ref = jnp.maximum(
        jnp.einsum("bse,eh->bsh", x, w1, precision="highest") + b1, 0.0)
    y_ref = jnp.einsum("bsh,he->bse", h_ref, w2, precision="highest") + b2
    z_ref = x + y_ref
    mu = jnp.mean(z_ref, axis=-1, keepdims=True)
    var = jnp.mean((z_ref - mu) ** 2, axis=-1, keepdims=True)
    ref = (z_ref - mu) / jnp.sqrt(var + 1e-5) * gamma + beta

    assert out.shape == (B, S, d_e)
    max_err = jnp.max(jnp.abs(out - ref))
    assert jnp.allclose(out, ref, atol=2e-3, rtol=2e-3), f"max abs err={max_err}"
    print("KERNEL_OK")
</pallas_src>

<mosaic_0001>
module attributes {stable_mosaic.version = 11 : i64} {
  func.func @_ffn_ln_kernel(%arg0: i32, %arg1: memref<256x128xf32, #tpu.memory_space<vmem>>, %arg2: memref<128x256xf32, #tpu.memory_space<vmem>>, %arg3: memref<1x256xf32, #tpu.memory_space<vmem>>, %arg4: memref<256x128xf32, #tpu.memory_space<vmem>>, %arg5: memref<1x128xf32, #tpu.memory_space<vmem>>, %arg6: memref<1x128xf32, #tpu.memory_space<vmem>>, %arg7: memref<1x128xf32, #tpu.memory_space<vmem>>, %arg8: memref<256x128xf32, #tpu.memory_space<vmem>>) attributes {dimension_semantics = [#tpu.dimension_semantics<parallel>], iteration_bounds = array<i64: 2>, scalar_prefetch = 0 : i64, scratch_operands = 0 : i64, tpu.core_type = #tpu.core_type<tc>, window_params = [{transform_indices = @transform_0, window_bounds = array<i64: 256, 128>}, {pipeline_mode = #tpu.pipeline_mode<synchronous>, transform_indices = @transform_1, window_bounds = array<i64: 128, 256>}, {pipeline_mode = #tpu.pipeline_mode<synchronous>, transform_indices = @transform_2, window_bounds = array<i64: 1, 256>}, {pipeline_mode = #tpu.pipeline_mode<synchronous>, transform_indices = @transform_3, window_bounds = array<i64: 256, 128>}, {pipeline_mode = #tpu.pipeline_mode<synchronous>, transform_indices = @transform_4, window_bounds = array<i64: 1, 128>}, {pipeline_mode = #tpu.pipeline_mode<synchronous>, transform_indices = @transform_5, window_bounds = array<i64: 1, 128>}, {pipeline_mode = #tpu.pipeline_mode<synchronous>, transform_indices = @transform_6, window_bounds = array<i64: 1, 128>}, {transform_indices = @transform_7, window_bounds = array<i64: 256, 128>}]} {
    %c0 = arith.constant 0 : index
    %c0_0 = arith.constant 0 : index
    %0 = vector.load %arg1[%c0, %c0_0] : memref<256x128xf32, #tpu.memory_space<vmem>>, vector<256x128xf32>
    %c0_1 = arith.constant 0 : index
    %c0_2 = arith.constant 0 : index
    %1 = vector.load %arg2[%c0_1, %c0_2] : memref<128x256xf32, #tpu.memory_space<vmem>>, vector<128x256xf32>
    %cst = arith.constant dense<0.000000e+00> : vector<256x256xf32>
    %2 = tpu.matmul %0, %1, %cst {dimension_numbers = #tpu.dot_dimension_numbers<[1], [0], [0], [1], [0, 0, 1, 1], [], []>} : vector<256x128xf32>, vector<128x256xf32>, vector<256x256xf32> -> vector<256x256xf32>
    %c0_3 = arith.constant 0 : index
    %c0_4 = arith.constant 0 : index
    %3 = vector.load %arg3[%c0_3, %c0_4] : memref<1x256xf32, #tpu.memory_space<vmem>>, vector<1x256xf32>
    %4 = vector.broadcast %3 : vector<1x256xf32> to vector<256x256xf32>
    %5 = arith.addf %2, %4 : vector<256x256xf32>
    %cst_5 = arith.constant 0.000000e+00 : f32
    %6 = vector.broadcast %cst_5 : f32 to vector<256x256xf32>
    %7 = arith.maximumf %5, %6 : vector<256x256xf32>
    %c0_6 = arith.constant 0 : index
    %c0_7 = arith.constant 0 : index
    %8 = vector.load %arg4[%c0_6, %c0_7] : memref<256x128xf32, #tpu.memory_space<vmem>>, vector<256x128xf32>
    %cst_8 = arith.constant dense<0.000000e+00> : vector<256x128xf32>
    %9 = tpu.matmul %7, %8, %cst_8 {dimension_numbers = #tpu.dot_dimension_numbers<[1], [0], [0], [1], [0, 0, 1, 1], [], []>} : vector<256x256xf32>, vector<256x128xf32>, vector<256x128xf32> -> vector<256x128xf32>
    %c0_9 = arith.constant 0 : index
    %c0_10 = arith.constant 0 : index
    %10 = vector.load %arg5[%c0_9, %c0_10] : memref<1x128xf32, #tpu.memory_space<vmem>>, vector<1x128xf32>
    %11 = vector.broadcast %10 : vector<1x128xf32> to vector<256x128xf32>
    %12 = arith.addf %9, %11 : vector<256x128xf32>
    %13 = arith.addf %0, %12 : vector<256x128xf32>
    %cst_11 = arith.constant dense<0.000000e+00> : vector<256xf32>
    %14 = vector.multi_reduction <add>, %13, %cst_11 [1] : vector<256x128xf32> to vector<256xf32>
    %15 = vector.shape_cast %14 : vector<256xf32> to vector<256x1xf32>
    %16 = arith.mulf %13, %13 : vector<256x128xf32>
    %cst_12 = arith.constant dense<0.000000e+00> : vector<256xf32>
    %17 = vector.multi_reduction <add>, %16, %cst_12 [1] : vector<256x128xf32> to vector<256xf32>
    %18 = vector.shape_cast %17 : vector<256xf32> to vector<256x1xf32>
    %cst_13 = arith.constant 7.812500e-03 : f32
    %19 = vector.broadcast %cst_13 : f32 to vector<256x1xf32>
    %20 = arith.mulf %15, %19 : vector<256x1xf32>
    %cst_14 = arith.constant 7.812500e-03 : f32
    %21 = vector.broadcast %cst_14 : f32 to vector<256x1xf32>
    %22 = arith.mulf %18, %21 : vector<256x1xf32>
    %23 = arith.mulf %20, %20 : vector<256x1xf32>
    %24 = arith.subf %22, %23 : vector<256x1xf32>
    %cst_15 = arith.constant 0.000000e+00 : f32
    %25 = vector.broadcast %cst_15 : f32 to vector<256x1xf32>
    %26 = arith.maximumf %24, %25 : vector<256x1xf32>
    %27 = vector.broadcast %20 : vector<256x1xf32> to vector<256x128xf32>
    %28 = arith.subf %13, %27 : vector<256x128xf32>
    %cst_16 = arith.constant 9.99999974E-6 : f32
    %29 = vector.broadcast %cst_16 : f32 to vector<256x1xf32>
    %30 = arith.addf %26, %29 : vector<256x1xf32>
    %31 = math.rsqrt %30 : vector<256x1xf32>
    %32 = vector.broadcast %31 : vector<256x1xf32> to vector<256x128xf32>
    %33 = arith.mulf %28, %32 : vector<256x128xf32>
    %c0_17 = arith.constant 0 : index
    %c0_18 = arith.constant 0 : index
    %34 = vector.load %arg6[%c0_17, %c0_18] : memref<1x128xf32, #tpu.memory_space<vmem>>, vector<1x128xf32>
    %35 = vector.broadcast %34 : vector<1x128xf32> to vector<256x128xf32>
    %36 = arith.mulf %33, %35 : vector<256x128xf32>
    %c0_19 = arith.constant 0 : index
    %c0_20 = arith.constant 0 : index
    %37 = vector.load %arg7[%c0_19, %c0_20] : memref<1x128xf32, #tpu.memory_space<vmem>>, vector<1x128xf32>
    %38 = vector.broadcast %37 : vector<1x128xf32> to vector<256x128xf32>
    %39 = arith.addf %36, %38 : vector<256x128xf32>
    %c0_21 = arith.constant 0 : index
    %c0_22 = arith.constant 0 : index
    %40 = vector.load %arg8[%c0_21, %c0_22] : memref<256x128xf32, #tpu.memory_space<vmem>>, vector<256x128xf32>
    tpu.vector_store %arg8[%c0_21, %c0_22], %39 {strides = array<i32>} : memref<256x128xf32, #tpu.memory_space<vmem>>, vector<256x128xf32>,
    return
  }
  func.func @transform_0(%arg0: i32) -> (i32, i32) {
    %c0_i32 = arith.constant 0 : i32
    %c0_i32_0 = arith.constant 0 : i32
    return %arg0, %c0_i32 : i32, i32
  }
  func.func @transform_1(%arg0: i32) -> (i32, i32) {
    %c0_i32 = arith.constant 0 : i32
    %c0_i32_0 = arith.constant 0 : i32
    %c0_i32_1 = arith.constant 0 : i32
    return %c0_i32, %c0_i32_0 : i32, i32
  }
  func.func @transform_2(%arg0: i32) -> (i32, i32) {
    %c0_i32 = arith.constant 0 : i32
    %c0_i32_0 = arith.constant 0 : i32
    %c0_i32_1 = arith.constant 0 : i32
    return %c0_i32, %c0_i32_0 : i32, i32
  }
  func.func @transform_3(%arg0: i32) -> (i32, i32) {
    %c0_i32 = arith.constant 0 : i32
    %c0_i32_0 = arith.constant 0 : i32
    %c0_i32_1 = arith.constant 0 : i32
    return %c0_i32, %c0_i32_0 : i32, i32
  }
  func.func @transform_4(%arg0: i32) -> (i32, i32) {
    %c0_i32 = arith.constant 0 : i32
    %c0_i32_0 = arith.constant 0 : i32
    %c0_i32_1 = arith.constant 0 : i32
    return %c0_i32, %c0_i32_0 : i32, i32
  }
  func.func @transform_5(%arg0: i32) -> (i32, i32) {
    %c0_i32 = arith.constant 0 : i32
    %c0_i32_0 = arith.constant 0 : i32
    %c0_i32_1 = arith.constant 0 : i32
    return %c0_i32, %c0_i32_0 : i32, i32
  }
  func.func @transform_6(%arg0: i32) -> (i32, i32) {
    %c0_i32 = arith.constant 0 : i32
    %c0_i32_0 = arith.constant 0 : i32
    %c0_i32_1 = arith.constant 0 : i32
    return %c0_i32, %c0_i32_0 : i32, i32
  }
  func.func @transform_7(%arg0: i32) -> (i32, i32) {
    %c0_i32 = arith.constant 0 : i32
    %c0_i32_0 = arith.constant 0 : i32
    return %arg0, %c0_i32 : i32, i32
  }
}

</mosaic_0001>

<llo_original>
// kernel: tpu_custom_call.1
$region0: #{tpu_custom_call.1}
  #allocation0 [shape = 'u32[]', space=smem, size = 0x4, offset = 0x4, fixed_abs, tag = 'smem constant byte address 0x4 - core index']
  #allocation1 [shape = 'u32[144,128]{1,0:T(1,128)}', space=vmem, size = 0x12000, scoped, tag = 'internal scratch']
  %s0 = inlined_call_operand.hbm [shape: f32[512,128], index: 0, kind: input, shape index: {}]
  %s1 = inlined_call_operand.hbm [shape: f32[128,256], index: 1, kind: input, shape index: {}]
  %s2 = inlined_call_operand.vmem [shape: f32[1,256], index: 2, kind: input, shape index: {}]
  %s3 = inlined_call_operand.hbm [shape: f32[256,128], index: 3, kind: input, shape index: {}]
  %s4 = inlined_call_operand.vmem [shape: f32[1,128], index: 4, kind: input, shape index: {}]
  %s5 = inlined_call_operand.vmem [shape: f32[1,128], index: 5, kind: input, shape index: {}]
  %s6 = inlined_call_operand.vmem [shape: f32[1,128], index: 6, kind: input, shape index: {}]
  %s7 = inlined_call_operand.hbm [shape: f32[512,128], index: 7, kind: output, shape index: {}]
  %s8 = sld [smem:[#allocation0]]
  $region73: #{tpu_custom_call.1} parent=0
    _
  %s10 = ssub.s32 1, %s8
  %s11 = scalar_select 0, %s10, %s8
  $region1: #{tpu_custom_call.1} parent=0
    #allocation2 [shape = 'u8[262144]{0}', space=vmem, size = 0x40000, scoped, tag = 'input window, operand 0']
    #allocation3 [shape = 's32[2]{0}', space=sflag, size = 0x8, scoped, tag = 'scoped memory for tpu_custom_call.1']
    #allocation4 [shape = 's32[2]{0}', space=sflag, size = 0x8, scoped, tag = 'scoped memory for tpu_custom_call.1']
    #allocation5 [shape = 'u8[131072]{0}', space=vmem, size = 0x20000, scoped, tag = 'input window, operand 1, single buffered']
    #allocation6 [shape = 's32[1]{0}', space=sflag, size = 0x4, scoped, tag = 'scoped memory for tpu_custom_call.1']
    #allocation7 [shape = 'u8[131072]{0}', space=vmem, size = 0x20000, scoped, tag = 'input window, operand 3, single buffered']
    #allocation8 [shape = 'u8[262144]{0}', space=vmem, size = 0x40000, scoped, tag = 'output window, operand 0']
    %12 = vsyncpa [#allocation3], 0
    %s13 = scalar_lea.sflag [#allocation3], 1
    %14 = vsyncpa %s13, 0
    %15 = vsyncpa [#allocation6], 0
    %16 = vsyncpa [#allocation4], 0
    %s17 = scalar_lea.sflag [#allocation4], 1
    %18 = vsyncpa %s17, 0
    loop: start=0, step=1, limit=4
    $region2: #{tpu_custom_call.1} parent=1 // loop_pre_header
      _
    $region3: #{tpu_custom_call.1} parent=1 // loop_header
      %s20 = sphi 0, %s24
      %p21 = scmp.ge.s32.totalorder %s20, 4
      %s30 = sphi 0, %s32
      %s33 = sphi 0, %s30
      %s34 = sphi 0, %s33
      %s50 = sphi 0, %s34
      %s54 = sphi 0, %s54
      %s56 = sphi 0, %s54
      %s57 = sphi 0, %s56
      %s71 = sphi 0, %s57
      %s75 = sphi 0, %s75
      %s77 = sphi 0, %s75
      %s78 = sphi 0, %s77
      %s92 = sphi 0, %s78
      %s96 = sphi 0, %s96
      %s98 = sphi 0, %s96
      %s99 = sphi 0, %s98
      %s113 = sphi 0, %s99
      %s117 = sphi 0, %s117
      %s119 = sphi 0, %s117
      %s120 = sphi 0, %s119
      %s134 = sphi 0, %s120
      %s138 = sphi 0, %s138
      %s140 = sphi 0, %s138
      %s141 = sphi 0, %s140
      %s155 = sphi 0, %s141
      %s159 = sphi 0, %s159
      %s161 = sphi 0, %s159
      %s162 = sphi 0, %s161
      %s176 = sphi 0, %s162
      %s182 = sphi 0, %s184
      %s185 = sphi 0, %s182
      %s186 = sphi 0, %s185
      %s202 = sphi 0, %s186
    $region4: #{tpu_custom_call.1} parent=1 // loop_header_branch
      %23 = sbr.rel (%p21) target = $region8
    $region5: #{tpu_custom_call.1} parent=1 // loop_body
      %s25 = ssub.s32 %s20, 1
      %s26 = ssub.s32 %s20, 2
      %s27 = sadd.s32 %s20, 1
      %s28 = ssub.s32 %s20, %s27
      %p29 = scmp.eq.s32.totalorder %s28, 0
      %s31 = sadd.s32 %s30, 1
      %s32 = scalar_select %p29, %s30, %s31
      %p35 = pneg %p29
      %p36 = scmp.eq.s32.totalorder %s20, 1
      %p37 = por %p35, %p36
      %p38 = scmp.ne.s32.totalorder %s30, %s33
      %p39 = scmp.eq.s32.totalorder %s20, 0
      %p40 = por %p38, %p39
      %p41 = scmp.ne.s32.totalorder %s30, %s33
      %p42 = scmp.eq.s32.totalorder %s25, 1
      %p43 = por %p41, %p42
      %p44 = scmp.ne.s32.totalorder %s33, %s34
      %p45 = scmp.eq.s32.totalorder %s25, 0
      %p46 = por %p44, %p45
      %p47 = scmp.ne.s32.totalorder %s33, %s34
      %p48 = scmp.eq.s32.totalorder %s26, 1
      %p49 = por %p47, %p48
      %p51 = scmp.ne.s32.totalorder %s34, %s50
      %p52 = scmp.eq.s32.totalorder %s26, 0
      %p53 = por %p51, %p52
      %s55 = sadd.s32 %s54, 1
      %p58 = scmp.eq.s32.totalorder %s20, 1
      %p59 = scmp.ne.s32.totalorder %s54, %s56
      %p60 = scmp.eq.s32.totalorder %s20, 0
      %p61 = por %p59, %p60
      %p62 = scmp.ne.s32.totalorder %s54, %s56
      %p63 = scmp.eq.s32.totalorder %s25, 1
      %p64 = por %p62, %p63
      %p65 = scmp.ne.s32.totalorder %s56, %s57
      %p66 = scmp.eq.s32.totalorder %s25, 0
      %p67 = por %p65, %p66
      %p68 = scmp.ne.s32.totalorder %s56, %s57
      %p69 = scmp.eq.s32.totalorder %s26, 1
      %p70 = por %p68, %p69
      %p72 = scmp.ne.s32.totalorder %s57, %s71
      %p73 = scmp.eq.s32.totalorder %s26, 0
      %p74 = por %p72, %p73
      %s76 = sadd.s32 %s75, 1
      %p79 = scmp.eq.s32.totalorder %s20, 1
      %p80 = scmp.ne.s32.totalorder %s75, %s77
      %p81 = scmp.eq.s32.totalorder %s20, 0
      %p82 = por %p80, %p81
      %p83 = scmp.ne.s32.totalorder %s75, %s77
      %p84 = scmp.eq.s32.totalorder %s25, 1
      %p85 = por %p83, %p84
      %p86 = scmp.ne.s32.totalorder %s77, %s78
      %p87 = scmp.eq.s32.totalorder %s25, 0
      %p88 = por %p86, %p87
      %p89 = scmp.ne.s32.totalorder %s77, %s78
      %p90 = scmp.eq.s32.totalorder %s26, 1
      %p91 = por %p89, %p90
      %p93 = scmp.ne.s32.totalorder %s78, %s92
      %p94 = scmp.eq.s32.totalorder %s26, 0
      %p95 = por %p93, %p94
      %s97 = sadd.s32 %s96, 1
      %p100 = scmp.eq.s32.totalorder %s20, 1
      %p101 = scmp.ne.s32.totalorder %s96, %s98
      %p102 = scmp.eq.s32.totalorder %s20, 0
      %p103 = por %p101, %p102
      %p104 = scmp.ne.s32.totalorder %s96, %s98
      %p105 = scmp.eq.s32.totalorder %s25, 1
      %p106 = por %p104, %p105
      %p107 = scmp.ne.s32.totalorder %s98, %s99
      %p108 = scmp.eq.s32.totalorder %s25, 0
      %p109 = por %p107, %p108
      %p110 = scmp.ne.s32.totalorder %s98, %s99
      %p111 = scmp.eq.s32.totalorder %s26, 1
      %p112 = por %p110, %p111
      %p114 = scmp.ne.s32.totalorder %s99, %s113
      %p115 = scmp.eq.s32.totalorder %s26, 0
      %p116 = por %p114, %p115
      %s118 = sadd.s32 %s117, 1
      %p121 = scmp.eq.s32.totalorder %s20, 1
      %p122 = scmp.ne.s32.totalorder %s117, %s119
      %p123 = scmp.eq.s32.totalorder %s20, 0
      %p124 = por %p122, %p123
      %p125 = scmp.ne.s32.totalorder %s117, %s119
      %p126 = scmp.eq.s32.totalorder %s25, 1
      %p127 = por %p125, %p126
      %p128 = scmp.ne.s32.totalorder %s119, %s120
      %p129 = scmp.eq.s32.totalorder %s25, 0
      %p130 = por %p128, %p129
      %p131 = scmp.ne.s32.totalorder %s119, %s120
      %p132 = scmp.eq.s32.totalorder %s26, 1
      %p133 = por %p131, %p132
      %p135 = scmp.ne.s32.totalorder %s120, %s134
      %p136 = scmp.eq.s32.totalorder %s26, 0
      %p137 = por %p135, %p136
      %s139 = sadd.s32 %s138, 1
      %p142 = scmp.eq.s32.totalorder %s20, 1
      %p143 = scmp.ne.s32.totalorder %s138, %s140
      %p144 = scmp.eq.s32.totalorder %s20, 0
      %p145 = por %p143, %p144
      %p146 = scmp.ne.s32.totalorder %s138, %s140
      %p147 = scmp.eq.s32.totalorder %s25, 1
      %p148 = por %p146, %p147
      %p149 = scmp.ne.s32.totalorder %s140, %s141
      %p150 = scmp.eq.s32.totalorder %s25, 0
      %p151 = por %p149, %p150
      %p152 = scmp.ne.s32.totalorder %s140, %s141
      %p153 = scmp.eq.s32.totalorder %s26, 1
      %p154 = por %p152, %p153
      %p156 = scmp.ne.s32.totalorder %s141, %s155
      %p157 = scmp.eq.s32.totalorder %s26, 0
      %p158 = por %p156, %p157
      %s160 = sadd.s32 %s159, 1
      %p163 = scmp.eq.s32.totalorder %s20, 1
      %p164 = scmp.ne.s32.totalorder %s159, %s161
      %p165 = scmp.eq.s32.totalorder %s20, 0
      %p166 = por %p164, %p165
      %p167 = scmp.ne.s32.totalorder %s159, %s161
      %p168 = scmp.eq.s32.totalorder %s25, 1
      %p169 = por %p167, %p168
      %p170 = scmp.ne.s32.totalorder %s161, %s162
      %p171 = scmp.eq.s32.totalorder %s25, 0
      %p172 = por %p170, %p171
      %p173 = scmp.ne.s32.totalorder %s161, %s162
      %p174 = scmp.eq.s32.totalorder %s26, 1
      %p175 = por %p173, %p174
      %p177 = scmp.ne.s32.totalorder %s162, %s176
      %p178 = scmp.eq.s32.totalorder %s26, 0
      %p179 = por %p177, %p178
      %s180 = ssub.s32 %s20, %s27
      %p181 = scmp.eq.s32.totalorder %s180, 0
      %s183 = sadd.s32 %s182, 1
      %s184 = scalar_select %p181, %s182, %s183
      %p187 = pneg %p181
      %p188 = scmp.eq.s32.totalorder %s20, 1
      %p189 = por %p187, %p188
      %p190 = scmp.ne.s32.totalorder %s182, %s185
      %p191 = scmp.eq.s32.totalorder %s20, 0
      %p192 = por %p190, %p191
      %p193 = scmp.ne.s32.totalorder %s182, %s185
      %p194 = scmp.eq.s32.totalorder %s25, 1
      %p195 = por %p193, %p194
      %p196 = scmp.ne.s32.totalorder %s185, %s186
      %p197 = scmp.eq.s32.totalorder %s25, 0
      %p198 = por %p196, %p197
      %p199 = scmp.ne.s32.totalorder %s185, %s186
      %p200 = scmp.eq.s32.totalorder %s26, 1
      %p201 = por %p199, %p200
      %p203 = scmp.ne.s32.totalorder %s186, %s202
      %p204 = scmp.eq.s32.totalorder %s26, 0
      %p205 = por %p203, %p204
      %p206 = scmp.le.s32.totalorder 1, %s20
      %p207 = scmp.lt.s32.totalorder %s20, 3
      %p208 = pnand %p206, %p207
      %p209 = pneg %p208
      // Predicated region
      $region9: #{tpu_custom_call.1} parent=5 // pred_check
        _
      $region10: #{tpu_custom_call.1} parent=5 // pred_check_branch
        %211 = sbr.rel (%p208) target = $region12
      $region11: #{tpu_custom_call.1} parent=5 // pred_region
        %s212 = ssub.s32 %s20, 1
        // Predicated region
        $region13: #{tpu_custom_call.1} parent=11 // pred_check
          %p213 = pneg %p67
        $region14: #{tpu_custom_call.1} parent=11 // pred_check_branch
          %215 = sbr.rel (%p213) target = $region16
        $region15: #{tpu_custom_call.1} parent=11 // pred_region
          %s217 = ssub.s32 4096, 4096
          %218 = vsyncadd [#allocation6], %s217
          %s219 = sshll.u32 [#allocation5], 4
          %s220 = int_to_ptr.vmem [resolvable:$true] %s219
          %225 = dma.hbm_to_vmem [thread:$0]  %s1, 4096, %s220, [#allocation6], 256, 256, 16
        $region16: #{tpu_custom_call.1} parent=11 // pred_fallthru
          _
        // Predicated region
        $region17: #{tpu_custom_call.1} parent=11 // pred_check
          %p226 = pneg %p88
        $region18: #{tpu_custom_call.1} parent=11 // pred_check_branch
          %228 = sbr.rel (%p226) target = $region20
        $region19: #{tpu_custom_call.1} parent=11 // pred_region
          _
        $region20: #{tpu_custom_call.1} parent=11 // pred_fallthru
          _
        // Predicated region
        $region21: #{tpu_custom_call.1} parent=11 // pred_check
          %p229 = pneg %p109
        $region22: #{tpu_custom_call.1} parent=11 // pred_check_branch
          %231 = sbr.rel (%p229) target = $region24
        $region23: #{tpu_custom_call.1} parent=11 // pred_region
          %s233 = ssub.s32 4096, 4096
          %234 = vsyncadd [#allocation6], %s233
          %s235 = sshll.u32 [#allocation7], 4
          %s236 = int_to_ptr.vmem [resolvable:$true] %s235
          %241 = dma.hbm_to_vmem [thread:$0]  %s3, 4096, %s236, [#allocation6], 128, 128, 8
        $region24: #{tpu_custom_call.1} parent=11 // pred_fallthru
          _
        // Predicated region
        $region25: #{tpu_custom_call.1} parent=11 // pred_check
          %p242 = pneg %p130
        $region26: #{tpu_custom_call.1} parent=11 // pred_check_branch
          %244 = sbr.rel (%p242) target = $region28
        $region27: #{tpu_custom_call.1} parent=11 // pred_region
          _
        $region28: #{tpu_custom_call.1} parent=11 // pred_fallthru
          _
        // Predicated region
        $region29: #{tpu_custom_call.1} parent=11 // pred_check
          %p245 = pneg %p151
        $region30: #{tpu_custom_call.1} parent=11 // pred_check_branch
          %247 = sbr.rel (%p245) target = $region32
        $region31: #{tpu_custom_call.1} parent=11 // pred_region
          _
        $region32: #{tpu_custom_call.1} parent=11 // pred_fallthru
          _
        // Predicated region
        $region33: #{tpu_custom_call.1} parent=11 // pred_check
          %p248 = pneg %p172
        $region34: #{tpu_custom_call.1} parent=11 // pred_check_branch
          %250 = sbr.rel (%p248) target = $region36
        $region35: #{tpu_custom_call.1} parent=11 // pred_region
          _
        $region36: #{tpu_custom_call.1} parent=11 // pred_fallthru
          _
      $region12: #{tpu_custom_call.1} parent=5 // pred_fallthru
        _
      %p251 = scmp.lt.s32.totalorder %s20, 2
      // Predicated region
      $region37: #{tpu_custom_call.1} parent=5 // pred_check
        %p252 = pneg %p251
      $region38: #{tpu_custom_call.1} parent=5 // pred_check_branch
        %254 = sbr.rel (%p252) target = $region40
      $region39: #{tpu_custom_call.1} parent=5 // pred_region
        // Predicated region
        $region41: #{tpu_custom_call.1} parent=39 // pred_check
          %p255 = pneg %p40
        $region42: #{tpu_custom_call.1} parent=39 // pred_check_branch
          %257 = sbr.rel (%p255) target = $region44
        $region43: #{tpu_custom_call.1} parent=39 // pred_region
          %s258 = sand.u32 %s30, 1
          %s259 = scalar_lea.sflag [#allocation3], %s258
          %s260 = sand.u32 %s30, 1
          %s261 = smul.addr %s260, 256
          %s262 = scalar_lea.vmem [#allocation2], %s261
          %s263 = smul.u32 32, %s20
          %s265 = ssub.s32 4096, 4096
          %266 = vsyncadd %s259, %s265
          %s267 = smul.addr %s263, 128
          %s268 = scalar_lea.hbm %s0, %s267
          %s269 = sshll.u32 %s262, 4
          %s270 = int_to_ptr.vmem [resolvable:$true] %s269
          %275 = dma.hbm_to_vmem [thread:$0]  %s268, 4096, %s270, %s259, 128, 128, 8
        $region44: #{tpu_custom_call.1} parent=39 // pred_fallthru
          _
      $region40: #{tpu_custom_call.1} parent=5 // pred_fallthru
        _
      %p276 = scmp.le.s32.totalorder 1, %s20
      %p277 = scmp.lt.s32.totalorder %s20, 3
      %p278 = pnand %p276, %p277
      %p279 = pneg %p278
      // Predicated region
      $region45: #{tpu_custom_call.1} parent=5 // pred_check
        _
      $region46: #{tpu_custom_call.1} parent=5 // pred_check_branch
        %281 = sbr.rel (%p278) target = $region48
      $region47: #{tpu_custom_call.1} parent=5 // pred_region
        %s282 = ssub.s32 %s20, 1
        %s283 = sand.u32 %s33, 1
        %s284 = scalar_lea.sflag [#allocation3], %s283
        %s285 = sand.u32 %s33, 1
        %s286 = smul.addr %s285, 256
        %s287 = scalar_lea.vmem [#allocation2], %s286
        // Predicated region
        $region49: #{tpu_custom_call.1} parent=47 // pred_check
          %p288 = pneg %p46
        $region50: #{tpu_custom_call.1} parent=47 // pred_check_branch
          %290 = sbr.rel (%p288) target = $region52
        $region51: #{tpu_custom_call.1} parent=47 // pred_region
          %291 = dma.done %s284, 4096
        $region52: #{tpu_custom_call.1} parent=47 // pred_fallthru
          _
        // Predicated region
        $region53: #{tpu_custom_call.1} parent=47 // pred_check
          %p292 = pneg %p67
        $region54: #{tpu_custom_call.1} parent=47 // pred_check_branch
          %294 = sbr.rel (%p292) target = $region56
        $region55: #{tpu_custom_call.1} parent=47 // pred_region
          %295 = dma.done [#allocation6], 4096
        $region56: #{tpu_custom_call.1} parent=47 // pred_fallthru
          _
        // Predicated region
        $region57: #{tpu_custom_call.1} parent=47 // pred_check
          %p296 = pneg %p109
        $region58: #{tpu_custom_call.1} parent=47 // pred_check_branch
          %298 = sbr.rel (%p296) target = $region60
        $region59: #{tpu_custom_call.1} parent=47 // pred_region
          %299 = dma.done [#allocation6], 4096
        $region60: #{tpu_custom_call.1} parent=47 // pred_fallthru
          _
        %s300 = sand.u32 %s33, 1
        %s301 = scalar_lea.sflag [#allocation3], %s300
        %s302 = sand.u32 %s33, 1
        %s303 = smul.addr %s302, 256
        %s304 = scalar_lea.vmem [#allocation2], %s303
        %p305 = pneg %p46
        %p306 = pneg %p43
        %p307 = pneg %p67
        %p308 = pneg %p64
        %p309 = pneg %p88
        %p310 = pneg %p85
        %p311 = pneg %p109
        %p312 = pneg %p106
        %p313 = pneg %p130
        %p314 = pneg %p127
        %p315 = pneg %p151
        %p316 = pneg %p148
        %p317 = pneg %p172
        %p318 = pneg %p169
        %p319 = pneg %p198
        %p320 = pneg %p195
        %s321 = sand.u32 %s185, 1
        %s322 = scalar_lea.sflag [#allocation4], %s321
        %s323 = sand.u32 %s185, 1
        %s324 = smul.addr %s323, 256
        %s325 = scalar_lea.vmem [#allocation8], %s324
        %s326 = smul.u32 32, %s25
        %s327 = smul.u32 32, %s25
        %v328 = vld [vmem:[%s287] sm:$0xff]
        %v329 = vld [vmem:[%s287 + $0x8] sm:$0xff]
        %v330 = vld [vmem:[%s287 + $0x10] sm:$0xff]
        %v331 = vld [vmem:[%s287 + $0x18] sm:$0xff]
        %v332 = vld [vmem:[%s287 + $0x20] sm:$0xff]
        %v333 = vld [vmem:[%s287 + $0x28] sm:$0xff]
        %v334 = vld [vmem:[%s287 + $0x30] sm:$0xff]
        %v335 = vld [vmem:[%s287 + $0x38] sm:$0xff]
        %v336 = vld [vmem:[%s287 + $0x40] sm:$0xff]
        %v337 = vld [vmem:[%s287 + $0x48] sm:$0xff]
        %v338 = vld [vmem:[%s287 + $0x50] sm:$0xff]
        %v339 = vld [vmem:[%s287 + $0x58] sm:$0xff]
        %v340 = vld [vmem:[%s287 + $0x60] sm:$0xff]
        %v341 = vld [vmem:[%s287 + $0x68] sm:$0xff]
        %v342 = vld [vmem:[%s287 + $0x70] sm:$0xff]
        %v343 = vld [vmem:[%s287 + $0x78] sm:$0xff]
        %v344 = vld [vmem:[%s287 + $0x80] sm:$0xff]
        %v345 = vld [vmem:[%s287 + $0x88] sm:$0xff]
        %v346 = vld [vmem:[%s287 + $0x90] sm:$0xff]
        %v347 = vld [vmem:[%s287 + $0x98] sm:$0xff]
        %v348 = vld [vmem:[%s287 + $0xa0] sm:$0xff]
        %v349 = vld [vmem:[%s287 + $0xa8] sm:$0xff]
        %v350 = vld [vmem:[%s287 + $0xb0] sm:$0xff]
        %v351 = vld [vmem:[%s287 + $0xb8] sm:$0xff]
        %v352 = vld [vmem:[%s287 + $0xc0] sm:$0xff]
        %v353 = vld [vmem:[%s287 + $0xc8] sm:$0xff]
        %v354 = vld [vmem:[%s287 + $0xd0] sm:$0xff]
        %v355 = vld [vmem:[%s287 + $0xd8] sm:$0xff]
        %v356 = vld [vmem:[%s287 + $0xe0] sm:$0xff]
        %v357 = vld [vmem:[%s287 + $0xe8] sm:$0xff]
        %v358 = vld [vmem:[%s287 + $0xf0] sm:$0xff]
        %v359 = vld [vmem:[%s287 + $0xf8] sm:$0xff]
        %v360 = vld [vmem:[#allocation5] sm:$0xff]
        %v361 = vld [vmem:[#allocation5 + $0x8] sm:$0xff]
        %v362 = vld [vmem:[#allocation5 + $0x10] sm:$0xff]
        %v363 = vld [vmem:[#allocation5 + $0x18] sm:$0xff]
        %v364 = vld [vmem:[#allocation5 + $0x20] sm:$0xff]
        %v365 = vld [vmem:[#allocation5 + $0x28] sm:$0xff]
        %v366 = vld [vmem:[#allocation5 + $0x30] sm:$0xff]
        %v367 = vld [vmem:[#allocation5 + $0x38] sm:$0xff]
        %v368 = vld [vmem:[#allocation5 + $0x40] sm:$0xff]
        %v369 = vld [vmem:[#allocation5 + $0x48] sm:$0xff]
        %v370 = vld [vmem:[#allocation5 + $0x50] sm:$0xff]
        %v371 = vld [vmem:[#allocation5 + $0x58] sm:$0xff]
        %v372 = vld [vmem:[#allocation5 + $0x60] sm:$0xff]
        %v373 = vld [vmem:[#allocation5 + $0x68] sm:$0xff]
        %v374 = vld [vmem:[#allocation5 + $0x70] sm:$0xff]
        %v375 = vld [vmem:[#allocation5 + $0x78] sm:$0xff]
        %v376 = vld [vmem:[#allocation5 + $0x80] sm:$0xff]
        %v377 = vld [vmem:[#allocation5 + $0x88] sm:$0xff]
        %v378 = vld [vmem:[#allocation5 + $0x90] sm:$0xff]
        %v379 = vld [vmem:[#allocation5 + $0x98] sm:$0xff]
        %v380 = vld [vmem:[#allocation5 + $0xa0] sm:$0xff]
        %v381 = vld [vmem:[#allocation5 + $0xa8] sm:$0xff]
        %v382 = vld [vmem:[#allocation5 + $0xb0] sm:$0xff]
        %v383 = vld [vmem:[#allocation5 + $0xb8] sm:$0xff]
        %v384 = vld [vmem:[#allocation5 + $0xc0] sm:$0xff]
        %v385 = vld [vmem:[#allocation5 + $0xc8] sm:$0xff]
        %v386 = vld [vmem:[#allocation5 + $0xd0] sm:$0xff]
        %v387 = vld [vmem:[#allocation5 + $0xd8] sm:$0xff]
        %v388 = vld [vmem:[#allocation5 + $0xe0] sm:$0xff]
        %v389 = vld [vmem:[#allocation5 + $0xe8] sm:$0xff]
        %v390 = vld [vmem:[#allocation5 + $0xf0] sm:$0xff]
        %v391 = vld [vmem:[#allocation5 + $0xf8] sm:$0xff]
        %v392 = vld [vmem:[%s2] sm:$0x3]
        %v394 = vlaneseq
        %v395 = vshrl.u32 %v394, 7
        %v396 = vsub.s32 0, %v395
        %v397 = vrot.slane %v392, %v396
        %v398 = vlaneseq
        %v399 = vshrl.u32 %v398, 7
        %v400 = vsub.s32 1, %v399
        %v401 = vrot.slane %v392, %v400
        %404 = vmatprep.subr.mxu0 %v361
        %405 = vmatpush1.msra.mxu0 %v360
        %406 = vmatprep.subr.mxu0 %v363
        %407 = vmatpush1.msra.mxu0 %v362
        %408 = vmatprep.subr.mxu0 %v365
        %409 = vmatpush1.msra.mxu0 %v364
        %410 = vmatprep.subr.mxu0 %v367
        %411 = vmatpush1.msra.mxu0 %v366
        %412 = vmatprep.subr.mxu0 %v369
        %413 = vmatpush1.msra.mxu0 %v368
        %414 = vmatprep.subr.mxu0 %v371
        %415 = vmatpush1.msra.mxu0 %v370
        %416 = vmatprep.subr.mxu0 %v373
        %417 = vmatpush1.msra.mxu0 %v372
        %418 = vmatprep.subr.mxu0 %v375
        %419 = vmatpush1.msra.mxu0 %v374
        %420 = vmatprep.subr.mxu0 %v377
        %421 = vmatpush1.msra.mxu0 %v376
        %422 = vmatprep.subr.mxu0 %v379
        %423 = vmatpush1.msra.mxu0 %v378
        %424 = vmatprep.subr.mxu0 %v381
        %425 = vmatpush1.msra.mxu0 %v380
        %426 = vmatprep.subr.mxu0 %v383
        %427 = vmatpush1.msra.mxu0 %v382
        %428 = vmatprep.subr.mxu0 %v385
        %429 = vmatpush1.msra.mxu0 %v384
        %430 = vmatprep.subr.mxu0 %v387
        %431 = vmatpush1.msra.mxu0 %v386
        %432 = vmatprep.subr.mxu0 %v389
        %433 = vmatpush1.msra.mxu0 %v388
        %434 = vmatprep.subr.mxu0 %v391
        %435 = vmatpush1.msra.mxu0 %v390
        %436 = vmatprep.subr.mxu0 0.0
        %437 = vmatpush1.msra.mxu0 0.0
        %438 = vmatprep.subr.mxu0 0.0
        %439 = vmatpush1.msra.mxu0 0.0
        %440 = vmatprep.subr.mxu0 0.0
        %441 = vmatpush1.msra.mxu0 0.0
        %442 = vmatprep.subr.mxu0 0.0
        %443 = vmatpush1.msra.mxu0 0.0
        %444 = vmatprep.subr.mxu0 0.0
        %445 = vmatpush1.msra.mxu0 0.0
        %446 = vmatprep.subr.mxu0 0.0
        %447 = vmatpush1.msra.mxu0 0.0
        %448 = vmatprep.subr.mxu0 0.0
        %449 = vmatpush1.msra.mxu0 0.0
        %450 = vmatprep.subr.mxu0 0.0
        %451 = vmatpush1.msra.mxu0 0.0
        %452 = vmatprep.subr.mxu0 0.0
        %453 = vmatpush1.msra.mxu0 0.0
        %454 = vmatprep.subr.mxu0 0.0
        %455 = vmatpush1.msra.mxu0 0.0
        %456 = vmatprep.subr.mxu0 0.0
        %457 = vmatpush1.msra.mxu0 0.0
        %458 = vmatprep.subr.mxu0 0.0
        %459 = vmatpush1.msra.mxu0 0.0
        %460 = vmatprep.subr.mxu0 0.0
        %461 = vmatpush1.msra.mxu0 0.0
        %462 = vmatprep.subr.mxu0 0.0
        %463 = vmatpush1.msra.mxu0 0.0
        %464 = vmatprep.subr.mxu0 0.0
        %465 = vmatpush1.msra.mxu0 0.0
        %466 = vmatprep.subr.mxu0 0.0
        %467 = vmatpush1.msra.mxu0 0.0
        %468 = vmatprep.mubr.f32.mxu0 0.0
        %469 = vmatmul.mubr.f32.gmra.mrb[0].mxu0 %v328
        %v470 = vpop.f32.mrb[0].mxu0
        %v471 = vadd.f32 %v397, %v470
        %v472 = vpop.f32.mrb[0].mxu0
        %v473 = vadd.f32 %v401, %v472
        %474 = vmatprep.mubr.f32.mxu0 0.0
        %475 = vmatmul.mubr.f32.gmra.mrb[0].mxu0 %v329
        %v476 = vpop.f32.mrb[0].mxu0
        %v477 = vadd.f32 %v397, %v476
        %v478 = vpop.f32.mrb[0].mxu0
        %v479 = vadd.f32 %v401, %v478
        %480 = vmatprep.mubr.f32.mxu0 0.0
        %481 = vmatmul.mubr.f32.gmra.mrb[0].mxu0 %v330
        %v482 = vpop.f32.mrb[0].mxu0
        %v483 = vadd.f32 %v397, %v482
        %v484 = vpop.f32.mrb[0].mxu0
        %v485 = vadd.f32 %v401, %v484
        %486 = vmatprep.mubr.f32.mxu0 0.0
        %487 = vmatmul.mubr.f32.gmra.mrb[0].mxu0 %v331
        %v488 = vpop.f32.mrb[0].mxu0
        %v489 = vadd.f32 %v397, %v488
        %v490 = vpop.f32.mrb[0].mxu0
        %v491 = vadd.f32 %v401, %v490
        %492 = vmatprep.mubr.f32.mxu0 0.0
        %493 = vmatmul.mubr.f32.gmra.mrb[0].mxu0 %v332
        %v494 = vpop.f32.mrb[0].mxu0
        %v495 = vadd.f32 %v397, %v494
        %v496 = vpop.f32.mrb[0].mxu0
        %v497 = vadd.f32 %v401, %v496
        %498 = vmatprep.mubr.f32.mxu0 0.0
        %499 = vmatmul.mubr.f32.gmra.mrb[0].mxu0 %v333
        %v500 = vpop.f32.mrb[0].mxu0
        %v501 = vadd.f32 %v397, %v500
        %v502 = vpop.f32.mrb[0].mxu0
        %v503 = vadd.f32 %v401, %v502
        %504 = vmatprep.mubr.f32.mxu0 0.0
        %505 = vmatmul.mubr.f32.gmra.mrb[0].mxu0 %v334
        %v506 = vpop.f32.mrb[0].mxu0
        %v507 = vadd.f32 %v397, %v506
        %v508 = vpop.f32.mrb[0].mxu0
        %v509 = vadd.f32 %v401, %v508
        %510 = vmatprep.mubr.f32.mxu0 0.0
        %511 = vmatmul.mubr.f32.gmra.mrb[0].mxu0 %v335
        %v512 = vpop.f32.mrb[0].mxu0
        %v513 = vadd.f32 %v397, %v512
        %v514 = vpop.f32.mrb[0].mxu0
        %v515 = vadd.f32 %v401, %v514
        %516 = vmatprep.mubr.f32.mxu0 0.0
        %517 = vmatmul.mubr.f32.gmra.mrb[0].mxu0 %v336
        %v518 = vpop.f32.mrb[0].mxu0
        %v519 = vadd.f32 %v397, %v518
        %v520 = vpop.f32.mrb[0].mxu0
        %v521 = vadd.f32 %v401, %v520
        %522 = vmatprep.mubr.f32.mxu0 0.0
        %523 = vmatmul.mubr.f32.gmra.mrb[0].mxu0 %v337
        %v524 = vpop.f32.mrb[0].mxu0
        %v525 = vadd.f32 %v397, %v524
        %v526 = vpop.f32.mrb[0].mxu0
        %v527 = vadd.f32 %v401, %v526
        %528 = vmatprep.mubr.f32.mxu0 0.0
        %529 = vmatmul.mubr.f32.gmra.mrb[0].mxu0 %v338
        %v530 = vpop.f32.mrb[0].mxu0
        %v531 = vadd.f32 %v397, %v530
        %v532 = vpop.f32.mrb[0].mxu0
        %v533 = vadd.f32 %v401, %v532
        %534 = vmatprep.mubr.f32.mxu0 0.0
        %535 = vmatmul.mubr.f32.gmra.mrb[0].mxu0 %v339
        %v536 = vpop.f32.mrb[0].mxu0
        %v537 = vadd.f32 %v397, %v536
        %v538 = vpop.f32.mrb[0].mxu0
        %v539 = vadd.f32 %v401, %v538
        %540 = vmatprep.mubr.f32.mxu0 0.0
        %541 = vmatmul.mubr.f32.gmra.mrb[0].mxu0 %v340
        %v542 = vpop.f32.mrb[0].mxu0
        %v543 = vadd.f32 %v397, %v542
        %v544 = vpop.f32.mrb[0].mxu0
        %v545 = vadd.f32 %v401, %v544
        %546 = vmatprep.mubr.f32.mxu0 0.0
        %547 = vmatmul.mubr.f32.gmra.mrb[0].mxu0 %v341
        %v548 = vpop.f32.mrb[0].mxu0
        %v549 = vadd.f32 %v397, %v548
        %v550 = vpop.f32.mrb[0].mxu0
        %v551 = vadd.f32 %v401, %v550
        %552 = vmatprep.mubr.f32.mxu0 0.0
        %553 = vmatmul.mubr.f32.gmra.mrb[0].mxu0 %v342
        %v554 = vpop.f32.mrb[0].mxu0
        %v555 = vadd.f32 %v397, %v554
        %v556 = vpop.f32.mrb[0].mxu0
        %v557 = vadd.f32 %v401, %v556
        %558 = vmatprep.mubr.f32.mxu0 0.0
        %559 = vmatmul.mubr.f32.gmra.mrb[0].mxu0 %v343
        %v560 = vpop.f32.mrb[0].mxu0
        %v561 = vadd.f32 %v397, %v560
        %v562 = vpop.f32.mrb[0].mxu0
        %v563 = vadd.f32 %v401, %v562
        %564 = vmatprep.mubr.f32.mxu0 0.0
        %565 = vmatmul.mubr.f32.gmra.mrb[0].mxu0 %v344
        %v566 = vpop.f32.mrb[0].mxu0
        %v567 = vadd.f32 %v397, %v566
        %v568 = vpop.f32.mrb[0].mxu0
        %v569 = vadd.f32 %v401, %v568
        %570 = vmatprep.mubr.f32.mxu0 0.0
        %571 = vmatmul.mubr.f32.gmra.mrb[0].mxu0 %v345
        %v572 = vpop.f32.mrb[0].mxu0
        %v573 = vadd.f32 %v397, %v572
        %v574 = vpop.f32.mrb[0].mxu0
        %v575 = vadd.f32 %v401, %v574
        %576 = vmatprep.mubr.f32.mxu0 0.0
        %577 = vmatmul.mubr.f32.gmra.mrb[0].mxu0 %v346
        %v578 = vpop.f32.mrb[0].mxu0
        %v579 = vadd.f32 %v397, %v578
        %v580 = vpop.f32.mrb[0].mxu0
        %v581 = vadd.f32 %v401, %v580
        %582 = vmatprep.mubr.f32.mxu0 0.0
        %583 = vmatmul.mubr.f32.gmra.mrb[0].mxu0 %v347
        %v584 = vpop.f32.mrb[0].mxu0
        %v585 = vadd.f32 %v397, %v584
        %v586 = vpop.f32.mrb[0].mxu0
        %v587 = vadd.f32 %v401, %v586
        %588 = vmatprep.mubr.f32.mxu0 0.0
        %589 = vmatmul.mubr.f32.gmra.mrb[0].mxu0 %v348
        %v590 = vpop.f32.mrb[0].mxu0
        %v591 = vadd.f32 %v397, %v590
        %v592 = vpop.f32.mrb[0].mxu0
        %v593 = vadd.f32 %v401, %v592
        %594 = vmatprep.mubr.f32.mxu0 0.0
        %595 = vmatmul.mubr.f32.gmra.mrb[0].mxu0 %v349
        %v596 = vpop.f32.mrb[0].mxu0
        %v597 = vadd.f32 %v397, %v596
        %v598 = vpop.f32.mrb[0].mxu0
        %v599 = vadd.f32 %v401, %v598
        %600 = vmatprep.mubr.f32.mxu0 0.0
        %601 = vmatmul.mubr.f32.gmra.mrb[0].mxu0 %v350
        %v602 = vpop.f32.mrb[0].mxu0
        %v603 = vadd.f32 %v397, %v602
        %v604 = vpop.f32.mrb[0].mxu0
        %v605 = vadd.f32 %v401, %v604
        %606 = vmatprep.mubr.f32.mxu0 0.0
        %607 = vmatmul.mubr.f32.gmra.mrb[0].mxu0 %v351
        %v608 = vpop.f32.mrb[0].mxu0
        %v609 = vadd.f32 %v397, %v608
        %v610 = vpop.f32.mrb[0].mxu0
        %v611 = vadd.f32 %v401, %v610
        %612 = vmatprep.mubr.f32.mxu0 0.0
        %613 = vmatmul.mubr.f32.gmra.mrb[0].mxu0 %v352
        %v614 = vpop.f32.mrb[0].mxu0
        %v615 = vadd.f32 %v397, %v614
        %v616 = vpop.f32.mrb[0].mxu0
        %v617 = vadd.f32 %v401, %v616
        %618 = vmatprep.mubr.f32.mxu0 0.0
        %619 = vmatmul.mubr.f32.gmra.mrb[0].mxu0 %v353
        %v620 = vpop.f32.mrb[0].mxu0
        %v621 = vadd.f32 %v397, %v620
        %v622 = vpop.f32.mrb[0].mxu0
        %v623 = vadd.f32 %v401, %v622
        %624 = vmatprep.mubr.f32.mxu0 0.0
        %625 = vmatmul.mubr.f32.gmra.mrb[0].mxu0 %v354
        %v626 = vpop.f32.mrb[0].mxu0
        %v627 = vadd.f32 %v397, %v626
        %v628 = vpop.f32.mrb[0].mxu0
        %v629 = vadd.f32 %v401, %v628
        %630 = vmatprep.mubr.f32.mxu0 0.0
        %631 = vmatmul.mubr.f32.gmra.mrb[0].mxu0 %v355
        %v632 = vpop.f32.mrb[0].mxu0
        %v633 = vadd.f32 %v397, %v632
        %v634 = vpop.f32.mrb[0].mxu0
        %v635 = vadd.f32 %v401, %v634
        %636 = vmatprep.mubr.f32.mxu0 0.0
        %637 = vmatmul.mubr.f32.gmra.mrb[0].mxu0 %v356
        %v638 = vpop.f32.mrb[0].mxu0
        %v639 = vadd.f32 %v397, %v638
        %v640 = vpop.f32.mrb[0].mxu0
        %v641 = vadd.f32 %v401, %v640
        %642 = vmatprep.mubr.f32.mxu0 0.0
        %643 = vmatmul.mubr.f32.gmra.mrb[0].mxu0 %v357
        %v644 = vpop.f32.mrb[0].mxu0
        %v645 = vadd.f32 %v397, %v644
        %v646 = vpop.f32.mrb[0].mxu0
        %v647 = vadd.f32 %v401, %v646
        %648 = vmatprep.mubr.f32.mxu0 0.0
        %649 = vmatmul.mubr.f32.gmra.mrb[0].mxu0 %v358
        %v650 = vpop.f32.mrb[0].mxu0
        %v651 = vadd.f32 %v397, %v650
        %v652 = vpop.f32.mrb[0].mxu0
        %v653 = vadd.f32 %v401, %v652
        %654 = vmatprep.mubr.f32.mxu0 0.0
        %655 = vmatmul.mubr.f32.gmra.mrb[0].mxu0 %v359
        %v656 = vpop.f32.mrb[0].mxu0
        %v657 = vadd.f32 %v397, %v656
        %v658 = vpop.f32.mrb[0].mxu0
        %v659 = vadd.f32 %v401, %v658
        %660 = vdwg.mxu0
        %v661 = vmax.f32 %v471, 0.0
        %v662 = vmax.f32 %v473, 0.0
        %v663 = vmax.f32 %v477, 0.0
        %v664 = vmax.f32 %v479, 0.0
        %v665 = vmax.f32 %v483, 0.0
        %v666 = vmax.f32 %v485, 0.0
        %v667 = vmax.f32 %v489, 0.0
        %v668 = vmax.f32 %v491, 0.0
        %v669 = vmax.f32 %v495, 0.0
        %v670 = vmax.f32 %v497, 0.0
        %v671 = vmax.f32 %v501, 0.0
        %v672 = vmax.f32 %v503, 0.0
        %v673 = vmax.f32 %v507, 0.0
        %v674 = vmax.f32 %v509, 0.0
        %v675 = vmax.f32 %v513, 0.0
        %v676 = vmax.f32 %v515, 0.0
        %v677 = vmax.f32 %v519, 0.0
        %v678 = vmax.f32 %v521, 0.0
        %v679 = vmax.f32 %v525, 0.0
        %v680 = vmax.f32 %v527, 0.0
        %v681 = vmax.f32 %v531, 0.0
        %v682 = vmax.f32 %v533, 0.0
        %v683 = vmax.f32 %v537, 0.0
        %v684 = vmax.f32 %v539, 0.0
        %v685 = vmax.f32 %v543, 0.0
        %v686 = vmax.f32 %v545, 0.0
        %v687 = vmax.f32 %v549, 0.0
        %v688 = vmax.f32 %v551, 0.0
        %v689 = vmax.f32 %v555, 0.0
        %v690 = vmax.f32 %v557, 0.0
        %v691 = vmax.f32 %v561, 0.0
        %v692 = vmax.f32 %v563, 0.0
        %v693 = vmax.f32 %v567, 0.0
        %v694 = vmax.f32 %v569, 0.0
        %v695 = vmax.f32 %v573, 0.0
        %v696 = vmax.f32 %v575, 0.0
        %v697 = vmax.f32 %v579, 0.0
        %v698 = vmax.f32 %v581, 0.0
        %v699 = vmax.f32 %v585, 0.0
        %v700 = vmax.f32 %v587, 0.0
        %v701 = vmax.f32 %v591, 0.0
        %v702 = vmax.f32 %v593, 0.0
        %v703 = vmax.f32 %v597, 0.0
        %v704 = vmax.f32 %v599, 0.0
        %v705 = vmax.f32 %v603, 0.0
        %v706 = vmax.f32 %v605, 0.0
        %v707 = vmax.f32 %v609, 0.0
        %v708 = vmax.f32 %v611, 0.0
        %v709 = vmax.f32 %v615, 0.0
        %v710 = vmax.f32 %v617, 0.0
        %v711 = vmax.f32 %v621, 0.0
        %v712 = vmax.f32 %v623, 0.0
        %v713 = vmax.f32 %v627, 0.0
        %v714 = vmax.f32 %v629, 0.0
        %v715 = vmax.f32 %v633, 0.0
        %v716 = vmax.f32 %v635, 0.0
        %v717 = vmax.f32 %v639, 0.0
        %v718 = vmax.f32 %v641, 0.0
        %v719 = vmax.f32 %v645, 0.0
        %v720 = vmax.f32 %v647, 0.0
        %v721 = vmax.f32 %v651, 0.0
        %v722 = vmax.f32 %v653, 0.0
        %v723 = vmax.f32 %v657, 0.0
        %v724 = vmax.f32 %v659, 0.0
        %v725 = vld [vmem:[#allocation7] sm:$0xff]
        %v726 = vld [vmem:[#allocation7 + $0x8] sm:$0xff]
        %v727 = vld [vmem:[#allocation7 + $0x10] sm:$0xff]
        %v728 = vld [vmem:[#allocation7 + $0x18] sm:$0xff]
        %v729 = vld [vmem:[#allocation7 + $0x20] sm:$0xff]
        %v730 = vld [vmem:[#allocation7 + $0x28] sm:$0xff]
        %v731 = vld [vmem:[#allocation7 + $0x30] sm:$0xff]
        %v732 = vld [vmem:[#allocation7 + $0x38] sm:$0xff]
        %v733 = vld [vmem:[#allocation7 + $0x40] sm:$0xff]
        %v734 = vld [vmem:[#allocation7 + $0x48] sm:$0xff]
        %v735 = vld [vmem:[#allocation7 + $0x50] sm:$0xff]
        %v736 = vld [vmem:[#allocation7 + $0x58] sm:$0xff]
        %v737 = vld [vmem:[#allocation7 + $0x60] sm:$0xff]
        %v738 = vld [vmem:[#allocation7 + $0x68] sm:$0xff]
        %v739 = vld [vmem:[#allocation7 + $0x70] sm:$0xff]
        %v740 = vld [vmem:[#allocation7 + $0x78] sm:$0xff]
        %v741 = vld [vmem:[#allocation7 + $0x80] sm:$0xff]
        %v742 = vld [vmem:[#allocation7 + $0x88] sm:$0xff]
        %v743 = vld [vmem:[#allocation7 + $0x90] sm:$0xff]
        %v744 = vld [vmem:[#allocation7 + $0x98] sm:$0xff]
        %v745 = vld [vmem:[#allocation7 + $0xa0] sm:$0xff]
        %v746 = vld [vmem:[#allocation7 + $0xa8] sm:$0xff]
        %v747 = vld [vmem:[#allocation7 + $0xb0] sm:$0xff]
        %v748 = vld [vmem:[#allocation7 + $0xb8] sm:$0xff]
        %v749 = vld [vmem:[#allocation7 + $0xc0] sm:$0xff]
        %v750 = vld [vmem:[#allocation7 + $0xc8] sm:$0xff]
        %v751 = vld [vmem:[#allocation7 + $0xd0] sm:$0xff]
        %v752 = vld [vmem:[#allocation7 + $0xd8] sm:$0xff]
        %v753 = vld [vmem:[#allocation7 + $0xe0] sm:$0xff]
        %v754 = vld [vmem:[#allocation7 + $0xe8] sm:$0xff]
        %v755 = vld [vmem:[#allocation7 + $0xf0] sm:$0xff]
        %v756 = vld [vmem:[#allocation7 + $0xf8] sm:$0xff]
        %v757 = vld [vmem:[%s4] sm:$0x1]
        %v759 = vlaneseq
        %v760 = vshrl.u32 %v759, 7
        %v761 = vsub.s32 0, %v760
        %v762 = vrot.slane %v757, %v761
        %764 = vmatprep.subr.mxu0 0.0
        %765 = vmatpush1.msra.mxu0 %v725
        %766 = vmatprep.subr.mxu0 0.0
        %767 = vmatpush1.msra.mxu0 %v726
        %768 = vmatprep.subr.mxu0 0.0
        %769 = vmatpush1.msra.mxu0 %v727
        %770 = vmatprep.subr.mxu0 0.0
        %771 = vmatpush1.msra.mxu0 %v728
        %772 = vmatprep.subr.mxu0 0.0
        %773 = vmatpush1.msra.mxu0 %v729
        %774 = vmatprep.subr.mxu0 0.0
        %775 = vmatpush1.msra.mxu0 %v730
        %776 = vmatprep.subr.mxu0 0.0
        %777 = vmatpush1.msra.mxu0 %v731
        %778 = vmatprep.subr.mxu0 0.0
        %779 = vmatpush1.msra.mxu0 %v732
        %780 = vmatprep.subr.mxu0 0.0
        %781 = vmatpush1.msra.mxu0 %v733
        %782 = vmatprep.subr.mxu0 0.0
        %783 = vmatpush1.msra.mxu0 %v734
        %784 = vmatprep.subr.mxu0 0.0
        %785 = vmatpush1.msra.mxu0 %v735
        %786 = vmatprep.subr.mxu0 0.0
        %787 = vmatpush1.msra.mxu0 %v736
        %788 = vmatprep.subr.mxu0 0.0
        %789 = vmatpush1.msra.mxu0 %v737
        %790 = vmatprep.subr.mxu0 0.0
        %791 = vmatpush1.msra.mxu0 %v738
        %792 = vmatprep.subr.mxu0 0.0
        %793 = vmatpush1.msra.mxu0 %v739
        %794 = vmatprep.subr.mxu0 0.0
        %795 = vmatpush1.msra.mxu0 %v740
        %796 = vmatprep.subr.mxu0 0.0
        %797 = vmatpush1.msra.mxu0 %v741
        %798 = vmatprep.subr.mxu0 0.0
        %799 = vmatpush1.msra.mxu0 %v742
        %800 = vmatprep.subr.mxu0 0.0
        %801 = vmatpush1.msra.mxu0 %v743
        %802 = vmatprep.subr.mxu0 0.0
        %803 = vmatpush1.msra.mxu0 %v744
        %804 = vmatprep.subr.mxu0 0.0
        %805 = vmatpush1.msra.mxu0 %v745
        %806 = vmatprep.subr.mxu0 0.0
        %807 = vmatpush1.msra.mxu0 %v746
        %808 = vmatprep.subr.mxu0 0.0
        %809 = vmatpush1.msra.mxu0 %v747
        %810 = vmatprep.subr.mxu0 0.0
        %811 = vmatpush1.msra.mxu0 %v748
        %812 = vmatprep.subr.mxu0 0.0
        %813 = vmatpush1.msra.mxu0 %v749
        %814 = vmatprep.subr.mxu0 0.0
        %815 = vmatpush1.msra.mxu0 %v750
        %816 = vmatprep.subr.mxu0 0.0
        %817 = vmatpush1.msra.mxu0 %v751
        %818 = vmatprep.subr.mxu0 0.0
        %819 = vmatpush1.msra.mxu0 %v752
        %820 = vmatprep.subr.mxu0 0.0
        %821 = vmatpush1.msra.mxu0 %v753
        %822 = vmatprep.subr.mxu0 0.0
        %823 = vmatpush1.msra.mxu0 %v754
        %824 = vmatprep.subr.mxu0 0.0
        %825 = vmatpush1.msra.mxu0 %v755
        %826 = vmatprep.subr.mxu0 0.0
        %827 = vmatpush1.msra.mxu0 %v756
        %828 = vmatprep.mubr.f32.mxu0 %v662
        %829 = vmatmul.mubr.f32.gmra.mrb[0].mxu0 %v661
        %v830 = vpop.f32.mrb[0].mxu0
        %v831 = vadd.f32 %v762, %v830
        %v832 = vpop.f32.mrb[0].mxu0
        %833 = vmatprep.mubr.f32.mxu0 %v664
        %834 = vmatmul.mubr.f32.gmra.mrb[0].mxu0 %v663
        %v835 = vpop.f32.mrb[0].mxu0
        %v836 = vadd.f32 %v762, %v835
        %v837 = vpop.f32.mrb[0].mxu0
        %838 = vmatprep.mubr.f32.mxu0 %v666
        %839 = vmatmul.mubr.f32.gmra.mrb[0].mxu0 %v665
        %v840 = vpop.f32.mrb[0].mxu0
        %v841 = vadd.f32 %v762, %v840
        %v842 = vpop.f32.mrb[0].mxu0
        %843 = vmatprep.mubr.f32.mxu0 %v668
        %844 = vmatmul.mubr.f32.gmra.mrb[0].mxu0 %v667
        %v845 = vpop.f32.mrb[0].mxu0
        %v846 = vadd.f32 %v762, %v845
        %v847 = vpop.f32.mrb[0].mxu0
        %848 = vmatprep.mubr.f32.mxu0 %v670
        %849 = vmatmul.mubr.f32.gmra.mrb[0].mxu0 %v669
        %v850 = vpop.f32.mrb[0].mxu0
        %v851 = vadd.f32 %v762, %v850
        %v852 = vpop.f32.mrb[0].mxu0
        %853 = vmatprep.mubr.f32.mxu0 %v672
        %854 = vmatmul.mubr.f32.gmra.mrb[0].mxu0 %v671
        %v855 = vpop.f32.mrb[0].mxu0
        %v856 = vadd.f32 %v762, %v855
        %v857 = vpop.f32.mrb[0].mxu0
        %858 = vmatprep.mubr.f32.mxu0 %v674
        %859 = vmatmul.mubr.f32.gmra.mrb[0].mxu0 %v673
        %v860 = vpop.f32.mrb[0].mxu0
        %v861 = vadd.f32 %v762, %v860
        %v862 = vpop.f32.mrb[0].mxu0
        %863 = vmatprep.mubr.f32.mxu0 %v676
        %864 = vmatmul.mubr.f32.gmra.mrb[0].mxu0 %v675
        %v865 = vpop.f32.mrb[0].mxu0
        %v866 = vadd.f32 %v762, %v865
        %v867 = vpop.f32.mrb[0].mxu0
        %868 = vmatprep.mubr.f32.mxu0 %v678
        %869 = vmatmul.mubr.f32.gmra.mrb[0].mxu0 %v677
        %v870 = vpop.f32.mrb[0].mxu0
        %v871 = vadd.f32 %v762, %v870
        %v872 = vpop.f32.mrb[0].mxu0
        %873 = vmatprep.mubr.f32.mxu0 %v680
        %874 = vmatmul.mubr.f32.gmra.mrb[0].mxu0 %v679
        %v875 = vpop.f32.mrb[0].mxu0
        %v876 = vadd.f32 %v762, %v875
        %v877 = vpop.f32.mrb[0].mxu0
        %878 = vmatprep.mubr.f32.mxu0 %v682
        %879 = vmatmul.mubr.f32.gmra.mrb[0].mxu0 %v681
        %v880 = vpop.f32.mrb[0].mxu0
        %v881 = vadd.f32 %v762, %v880
        %v882 = vpop.f32.mrb[0].mxu0
        %883 = vmatprep.mubr.f32.mxu0 %v684
        %884 = vmatmul.mubr.f32.gmra.mrb[0].mxu0 %v683
        %v885 = vpop.f32.mrb[0].mxu0
        %v886 = vadd.f32 %v762, %v885
        %v887 = vpop.f32.mrb[0].mxu0
        %888 = vmatprep.mubr.f32.mxu0 %v686
        %889 = vmatmul.mubr.f32.gmra.mrb[0].mxu0 %v685
        %v890 = vpop.f32.mrb[0].mxu0
        %v891 = vadd.f32 %v762, %v890
        %v892 = vpop.f32.mrb[0].mxu0
        %893 = vmatprep.mubr.f32.mxu0 %v688
        %894 = vmatmul.mubr.f32.gmra.mrb[0].mxu0 %v687
        %v895 = vpop.f32.mrb[0].mxu0
        %v896 = vadd.f32 %v762, %v895
        %v897 = vpop.f32.mrb[0].mxu0
        %898 = vmatprep.mubr.f32.mxu0 %v690
        %899 = vmatmul.mubr.f32.gmra.mrb[0].mxu0 %v689
        %v900 = vpop.f32.mrb[0].mxu0
        %v901 = vadd.f32 %v762, %v900
        %v902 = vpop.f32.mrb[0].mxu0
        %903 = vmatprep.mubr.f32.mxu0 %v692
        %904 = vmatmul.mubr.f32.gmra.mrb[0].mxu0 %v691
        %v905 = vpop.f32.mrb[0].mxu0
        %v906 = vadd.f32 %v762, %v905
        %v907 = vpop.f32.mrb[0].mxu0
        %908 = vmatprep.mubr.f32.mxu0 %v694
        %909 = vmatmul.mubr.f32.gmra.mrb[0].mxu0 %v693
        %v910 = vpop.f32.mrb[0].mxu0
        %v911 = vadd.f32 %v762, %v910
        %v912 = vpop.f32.mrb[0].mxu0
        %913 = vmatprep.mubr.f32.mxu0 %v696
        %914 = vmatmul.mubr.f32.gmra.mrb[0].mxu0 %v695
        %v915 = vpop.f32.mrb[0].mxu0
        %v916 = vadd.f32 %v762, %v915
        %v917 = vpop.f32.mrb[0].mxu0
        %918 = vmatprep.mubr.f32.mxu0 %v698
        %919 = vmatmul.mubr.f32.gmra.mrb[0].mxu0 %v697
        %v920 = vpop.f32.mrb[0].mxu0
        %v921 = vadd.f32 %v762, %v920
        %v922 = vpop.f32.mrb[0].mxu0
        %923 = vmatprep.mubr.f32.mxu0 %v700
        %924 = vmatmul.mubr.f32.gmra.mrb[0].mxu0 %v699
        %v925 = vpop.f32.mrb[0].mxu0
        %v926 = vadd.f32 %v762, %v925
        %v927 = vpop.f32.mrb[0].mxu0
        %928 = vmatprep.mubr.f32.mxu0 %v702
        %929 = vmatmul.mubr.f32.gmra.mrb[0].mxu0 %v701
        %v930 = vpop.f32.mrb[0].mxu0
        %v931 = vadd.f32 %v762, %v930
        %v932 = vpop.f32.mrb[0].mxu0
        %933 = vmatprep.mubr.f32.mxu0 %v704
        %934 = vmatmul.mubr.f32.gmra.mrb[0].mxu0 %v703
        %v935 = vpop.f32.mrb[0].mxu0
        %v936 = vadd.f32 %v762, %v935
        %v937 = vpop.f32.mrb[0].mxu0
        %938 = vmatprep.mubr.f32.mxu0 %v706
        %939 = vmatmul.mubr.f32.gmra.mrb[0].mxu0 %v705
        %v940 = vpop.f32.mrb[0].mxu0
        %v941 = vadd.f32 %v762, %v940
        %v942 = vpop.f32.mrb[0].mxu0
        %943 = vmatprep.mubr.f32.mxu0 %v708
        %944 = vmatmul.mubr.f32.gmra.mrb[0].mxu0 %v707
        %v945 = vpop.f32.mrb[0].mxu0
        %v946 = vadd.f32 %v762, %v945
        %v947 = vpop.f32.mrb[0].mxu0
        %948 = vmatprep.mubr.f32.mxu0 %v710
        %949 = vmatmul.mubr.f32.gmra.mrb[0].mxu0 %v709
        %v950 = vpop.f32.mrb[0].mxu0
        %v951 = vadd.f32 %v762, %v950
        %v952 = vpop.f32.mrb[0].mxu0
        %953 = vmatprep.mubr.f32.mxu0 %v712
        %954 = vmatmul.mubr.f32.gmra.mrb[0].mxu0 %v711
        %v955 = vpop.f32.mrb[0].mxu0
        %v956 = vadd.f32 %v762, %v955
        %v957 = vpop.f32.mrb[0].mxu0
        %958 = vmatprep.mubr.f32.mxu0 %v714
        %959 = vmatmul.mubr.f32.gmra.mrb[0].mxu0 %v713
        %v960 = vpop.f32.mrb[0].mxu0
        %v961 = vadd.f32 %v762, %v960
        %v962 = vpop.f32.mrb[0].mxu0
        %963 = vmatprep.mubr.f32.mxu0 %v716
        %964 = vmatmul.mubr.f32.gmra.mrb[0].mxu0 %v715
        %v965 = vpop.f32.mrb[0].mxu0
        %v966 = vadd.f32 %v762, %v965
        %v967 = vpop.f32.mrb[0].mxu0
        %968 = vmatprep.mubr.f32.mxu0 %v718
        %969 = vmatmul.mubr.f32.gmra.mrb[0].mxu0 %v717
        %v970 = vpop.f32.mrb[0].mxu0
        %v971 = vadd.f32 %v762, %v970
        %v972 = vpop.f32.mrb[0].mxu0
        %973 = vmatprep.mubr.f32.mxu0 %v720
        %974 = vmatmul.mubr.f32.gmra.mrb[0].mxu0 %v719
        %v975 = vpop.f32.mrb[0].mxu0
        %v976 = vadd.f32 %v762, %v975
        %v977 = vpop.f32.mrb[0].mxu0
        %978 = vmatprep.mubr.f32.mxu0 %v722
        %979 = vmatmul.mubr.f32.gmra.mrb[0].mxu0 %v721
        %v980 = vpop.f32.mrb[0].mxu0
        %v981 = vadd.f32 %v762, %v980
        %v982 = vpop.f32.mrb[0].mxu0
        %983 = vmatprep.mubr.f32.mxu0 %v724
        %984 = vmatmul.mubr.f32.gmra.mrb[0].mxu0 %v723
        %v985 = vpop.f32.mrb[0].mxu0
        %v986 = vadd.f32 %v762, %v985
        %v987 = vpop.f32.mrb[0].mxu0
        %988 = vdwg.mxu0
        %v989 = vadd.f32 %v328, %v831
        %v990 = vadd.f32 %v329, %v836
        %v991 = vadd.f32 %v330, %v841
        %v992 = vadd.f32 %v331, %v846
        %v993 = vadd.f32 %v332, %v851
        %v994 = vadd.f32 %v333, %v856
        %v995 = vadd.f32 %v334, %v861
        %v996 = vadd.f32 %v335, %v866
        %v997 = vadd.f32 %v336, %v871
        %v998 = vadd.f32 %v337, %v876
        %v999 = vadd.f32 %v338, %v881
        %v1000 = vadd.f32 %v339, %v886
        %v1001 = vadd.f32 %v340, %v891
        %v1002 = vadd.f32 %v341, %v896
        %v1003 = vadd.f32 %v342, %v901
        %v1004 = vadd.f32 %v343, %v906
        %v1005 = vadd.f32 %v344, %v911
        %v1006 = vadd.f32 %v345, %v916
        %v1007 = vadd.f32 %v346, %v921
        %v1008 = vadd.f32 %v347, %v926
        %v1009 = vadd.f32 %v348, %v931
        %v1010 = vadd.f32 %v349, %v936
        %v1011 = vadd.f32 %v350, %v941
        %v1012 = vadd.f32 %v351, %v946
        %v1013 = vadd.f32 %v352, %v951
        %v1014 = vadd.f32 %v353, %v956
        %v1015 = vadd.f32 %v354, %v961
        %v1016 = vadd.f32 %v355, %v966
        %v1017 = vadd.f32 %v356, %v971
        %v1018 = vadd.f32 %v357, %v976
        %v1019 = vadd.f32 %v358, %v981
        %v1020 = vadd.f32 %v359, %v986
        %1021 = vadd.xlane.f32.xlu0 %v989
        %v1022 = vpop.xlane.xlu0 %1021
        %1023 = vadd.xlane.f32.xlu0 %v990
        %v1024 = vpop.xlane.xlu0 %1023
        %1025 = vadd.xlane.f32.xlu0 %v991
        %v1026 = vpop.xlane.xlu0 %1025
        %1027 = vadd.xlane.f32.xlu0 %v992
        %v1028 = vpop.xlane.xlu0 %1027
        %1029 = vadd.xlane.f32.xlu0 %v993
        %v1030 = vpop.xlane.xlu0 %1029
        %1031 = vadd.xlane.f32.xlu0 %v994
        %v1032 = vpop.xlane.xlu0 %1031
        %1033 = vadd.xlane.f32.xlu0 %v995
        %v1034 = vpop.xlane.xlu0 %1033
        %1035 = vadd.xlane.f32.xlu0 %v996
        %v1036 = vpop.xlane.xlu0 %1035
        %1037 = vadd.xlane.f32.xlu0 %v997
        %v1038 = vpop.xlane.xlu0 %1037
        %1039 = vadd.xlane.f32.xlu0 %v998
        %v1040 = vpop.xlane.xlu0 %1039
        %1041 = vadd.xlane.f32.xlu0 %v999
        %v1042 = vpop.xlane.xlu0 %1041
        %1043 = vadd.xlane.f32.xlu0 %v1000
        %v1044 = vpop.xlane.xlu0 %1043
        %1045 = vadd.xlane.f32.xlu0 %v1001
        %v1046 = vpop.xlane.xlu0 %1045
        %1047 = vadd.xlane.f32.xlu0 %v1002
        %v1048 = vpop.xlane.xlu0 %1047
        %1049 = vadd.xlane.f32.xlu0 %v1003
        %v1050 = vpop.xlane.xlu0 %1049
        %1051 = vadd.xlane.f32.xlu0 %v1004
        %v1052 = vpop.xlane.xlu0 %1051
        %1053 = vadd.xlane.f32.xlu0 %v1005
        %v1054 = vpop.xlane.xlu0 %1053
        %1055 = vadd.xlane.f32.xlu0 %v1006
        %v1056 = vpop.xlane.xlu0 %1055
        %1057 = vadd.xlane.f32.xlu0 %v1007
        %v1058 = vpop.xlane.xlu0 %1057
        %1059 = vadd.xlane.f32.xlu0 %v1008
        %v1060 = vpop.xlane.xlu0 %1059
        %1061 = vadd.xlane.f32.xlu0 %v1009
        %v1062 = vpop.xlane.xlu0 %1061
        %1063 = vadd.xlane.f32.xlu0 %v1010
        %v1064 = vpop.xlane.xlu0 %1063
        %1065 = vadd.xlane.f32.xlu0 %v1011
        %v1066 = vpop.xlane.xlu0 %1065
        %1067 = vadd.xlane.f32.xlu0 %v1012
        %v1068 = vpop.xlane.xlu0 %1067
        %1069 = vadd.xlane.f32.xlu0 %v1013
        %v1070 = vpop.xlane.xlu0 %1069
        %1071 = vadd.xlane.f32.xlu0 %v1014
        %v1072 = vpop.xlane.xlu0 %1071
        %1073 = vadd.xlane.f32.xlu0 %v1015
        %v1074 = vpop.xlane.xlu0 %1073
        %1075 = vadd.xlane.f32.xlu0 %v1016
        %v1076 = vpop.xlane.xlu0 %1075
        %1077 = vadd.xlane.f32.xlu0 %v1017
        %v1078 = vpop.xlane.xlu0 %1077
        %1079 = vadd.xlane.f32.xlu0 %v1018
        %v1080 = vpop.xlane.xlu0 %1079
        %1081 = vadd.xlane.f32.xlu0 %v1019
        %v1082 = vpop.xlane.xlu0 %1081
        %1083 = vadd.xlane.f32.xlu0 %v1020
        %v1084 = vpop.xlane.xlu0 %1083
        %v1085 = vmul.f32 %v989, %v989
        %v1086 = vmul.f32 %v990, %v990
        %v1087 = vmul.f32 %v991, %v991
        %v1088 = vmul.f32 %v992, %v992
        %v1089 = vmul.f32 %v993, %v993
        %v1090 = vmul.f32 %v994, %v994
        %v1091 = vmul.f32 %v995, %v995
        %v1092 = vmul.f32 %v996, %v996
        %v1093 = vmul.f32 %v997, %v997
        %v1094 = vmul.f32 %v998, %v998
        %v1095 = vmul.f32 %v999, %v999
        %v1096 = vmul.f32 %v1000, %v1000
        %v1097 = vmul.f32 %v1001, %v1001
        %v1098 = vmul.f32 %v1002, %v1002
        %v1099 = vmul.f32 %v1003, %v1003
        %v1100 = vmul.f32 %v1004, %v1004
        %v1101 = vmul.f32 %v1005, %v1005
        %v1102 = vmul.f32 %v1006, %v1006
        %v1103 = vmul.f32 %v1007, %v1007
        %v1104 = vmul.f32 %v1008, %v1008
        %v1105 = vmul.f32 %v1009, %v1009
        %v1106 = vmul.f32 %v1010, %v1010
        %v1107 = vmul.f32 %v1011, %v1011
        %v1108 = vmul.f32 %v1012, %v1012
        %v1109 = vmul.f32 %v1013, %v1013
        %v1110 = vmul.f32 %v1014, %v1014
        %v1111 = vmul.f32 %v1015, %v1015
        %v1112 = vmul.f32 %v1016, %v1016
        %v1113 = vmul.f32 %v1017, %v1017
        %v1114 = vmul.f32 %v1018, %v1018
        %v1115 = vmul.f32 %v1019, %v1019
        %v1116 = vmul.f32 %v1020, %v1020
        %1117 = vadd.xlane.f32.xlu0 %v1085
        %v1118 = vpop.xlane.xlu0 %1117
        %1119 = vadd.xlane.f32.xlu0 %v1086
        %v1120 = vpop.xlane.xlu0 %1119
        %1121 = vadd.xlane.f32.xlu0 %v1087
        %v1122 = vpop.xlane.xlu0 %1121
        %1123 = vadd.xlane.f32.xlu0 %v1088
        %v1124 = vpop.xlane.xlu0 %1123
        %1125 = vadd.xlane.f32.xlu0 %v1089
        %v1126 = vpop.xlane.xlu0 %1125
        %1127 = vadd.xlane.f32.xlu0 %v1090
        %v1128 = vpop.xlane.xlu0 %1127
        %1129 = vadd.xlane.f32.xlu0 %v1091
        %v1130 = vpop.xlane.xlu0 %1129
        %1131 = vadd.xlane.f32.xlu0 %v1092
        %v1132 = vpop.xlane.xlu0 %1131
        %1133 = vadd.xlane.f32.xlu0 %v1093
        %v1134 = vpop.xlane.xlu0 %1133
        %1135 = vadd.xlane.f32.xlu0 %v1094
        %v1136 = vpop.xlane.xlu0 %1135
        %1137 = vadd.xlane.f32.xlu0 %v1095
        %v1138 = vpop.xlane.xlu0 %1137
        %1139 = vadd.xlane.f32.xlu0 %v1096
        %v1140 = vpop.xlane.xlu0 %1139
        %1141 = vadd.xlane.f32.xlu0 %v1097
        %v1142 = vpop.xlane.xlu0 %1141
        %1143 = vadd.xlane.f32.xlu0 %v1098
        %v1144 = vpop.xlane.xlu0 %1143
        %1145 = vadd.xlane.f32.xlu0 %v1099
        %v1146 = vpop.xlane.xlu0 %1145
        %1147 = vadd.xlane.f32.xlu0 %v1100
        %v1148 = vpop.xlane.xlu0 %1147
        %1149 = vadd.xlane.f32.xlu0 %v1101
        %v1150 = vpop.xlane.xlu0 %1149
        %1151 = vadd.xlane.f32.xlu0 %v1102
        %v1152 = vpop.xlane.xlu0 %1151
        %1153 = vadd.xlane.f32.xlu0 %v1103
        %v1154 = vpop.xlane.xlu0 %1153
        %1155 = vadd.xlane.f32.xlu0 %v1104
        %v1156 = vpop.xlane.xlu0 %1155
        %1157 = vadd.xlane.f32.xlu0 %v1105
        %v1158 = vpop.xlane.xlu0 %1157
        %1159 = vadd.xlane.f32.xlu0 %v1106
        %v1160 = vpop.xlane.xlu0 %1159
        %1161 = vadd.xlane.f32.xlu0 %v1107
        %v1162 = vpop.xlane.xlu0 %1161
        %1163 = vadd.xlane.f32.xlu0 %v1108
        %v1164 = vpop.xlane.xlu0 %1163
        %1165 = vadd.xlane.f32.xlu0 %v1109
        %v1166 = vpop.xlane.xlu0 %1165
        %1167 = vadd.xlane.f32.xlu0 %v1110
        %v1168 = vpop.xlane.xlu0 %1167
        %1169 = vadd.xlane.f32.xlu0 %v1111
        %v1170 = vpop.xlane.xlu0 %1169
        %1171 = vadd.xlane.f32.xlu0 %v1112
        %v1172 = vpop.xlane.xlu0 %1171
        %1173 = vadd.xlane.f32.xlu0 %v1113
        %v1174 = vpop.xlane.xlu0 %1173
        %1175 = vadd.xlane.f32.xlu0 %v1114
        %v1176 = vpop.xlane.xlu0 %1175
        %1177 = vadd.xlane.f32.xlu0 %v1115
        %v1178 = vpop.xlane.xlu0 %1177
        %1179 = vadd.xlane.f32.xlu0 %v1116
        %v1180 = vpop.xlane.xlu0 %1179
        %v1181 = vmul.f32 %v1022, 0.0078125
        %v1182 = vmul.f32 %v1024, 0.0078125
        %v1183 = vmul.f32 %v1026, 0.0078125
        %v1184 = vmul.f32 %v1028, 0.0078125
        %v1185 = vmul.f32 %v1030, 0.0078125
        %v1186 = vmul.f32 %v1032, 0.0078125
        %v1187 = vmul.f32 %v1034, 0.0078125
        %v1188 = vmul.f32 %v1036, 0.0078125
        %v1189 = vmul.f32 %v1038, 0.0078125
        %v1190 = vmul.f32 %v1040, 0.0078125
        %v1191 = vmul.f32 %v1042, 0.0078125
        %v1192 = vmul.f32 %v1044, 0.0078125
        %v1193 = vmul.f32 %v1046, 0.0078125
        %v1194 = vmul.f32 %v1048, 0.0078125
        %v1195 = vmul.f32 %v1050, 0.0078125
        %v1196 = vmul.f32 %v1052, 0.0078125
        %v1197 = vmul.f32 %v1054, 0.0078125
        %v1198 = vmul.f32 %v1056, 0.0078125
        %v1199 = vmul.f32 %v1058, 0.0078125
        %v1200 = vmul.f32 %v1060, 0.0078125
        %v1201 = vmul.f32 %v1062, 0.0078125
        %v1202 = vmul.f32 %v1064, 0.0078125
        %v1203 = vmul.f32 %v1066, 0.0078125
        %v1204 = vmul.f32 %v1068, 0.0078125
        %v1205 = vmul.f32 %v1070, 0.0078125
        %v1206 = vmul.f32 %v1072, 0.0078125
        %v1207 = vmul.f32 %v1074, 0.0078125
        %v1208 = vmul.f32 %v1076, 0.0078125
        %v1209 = vmul.f32 %v1078, 0.0078125
        %v1210 = vmul.f32 %v1080, 0.0078125
        %v1211 = vmul.f32 %v1082, 0.0078125
        %v1212 = vmul.f32 %v1084, 0.0078125
        %v1213 = vmul.f32 %v1118, 0.0078125
        %v1214 = vmul.f32 %v1120, 0.0078125
        %v1215 = vmul.f32 %v1122, 0.0078125
        %v1216 = vmul.f32 %v1124, 0.0078125
        %v1217 = vmul.f32 %v1126, 0.0078125
        %v1218 = vmul.f32 %v1128, 0.0078125
        %v1219 = vmul.f32 %v1130, 0.0078125
        %v1220 = vmul.f32 %v1132, 0.0078125
        %v1221 = vmul.f32 %v1134, 0.0078125
        %v1222 = vmul.f32 %v1136, 0.0078125
        %v1223 = vmul.f32 %v1138, 0.0078125
        %v1224 = vmul.f32 %v1140, 0.0078125
        %v1225 = vmul.f32 %v1142, 0.0078125
        %v1226 = vmul.f32 %v1144, 0.0078125
        %v1227 = vmul.f32 %v1146, 0.0078125
        %v1228 = vmul.f32 %v1148, 0.0078125
        %v1229 = vmul.f32 %v1150, 0.0078125
        %v1230 = vmul.f32 %v1152, 0.0078125
        %v1231 = vmul.f32 %v1154, 0.0078125
        %v1232 = vmul.f32 %v1156, 0.0078125
        %v1233 = vmul.f32 %v1158, 0.0078125
        %v1234 = vmul.f32 %v1160, 0.0078125
        %v1235 = vmul.f32 %v1162, 0.0078125
        %v1236 = vmul.f32 %v1164, 0.0078125
        %v1237 = vmul.f32 %v1166, 0.0078125
        %v1238 = vmul.f32 %v1168, 0.0078125
        %v1239 = vmul.f32 %v1170, 0.0078125
        %v1240 = vmul.f32 %v1172, 0.0078125
        %v1241 = vmul.f32 %v1174, 0.0078125
        %v1242 = vmul.f32 %v1176, 0.0078125
        %v1243 = vmul.f32 %v1178, 0.0078125
        %v1244 = vmul.f32 %v1180, 0.0078125
        %v1245 = vmul.f32 %v1181, %v1181
        %v1246 = vmul.f32 %v1182, %v1182
        %v1247 = vmul.f32 %v1183, %v1183
        %v1248 = vmul.f32 %v1184, %v1184
        %v1249 = vmul.f32 %v1185, %v1185
        %v1250 = vmul.f32 %v1186, %v1186
        %v1251 = vmul.f32 %v1187, %v1187
        %v1252 = vmul.f32 %v1188, %v1188
        %v1253 = vmul.f32 %v1189, %v1189
        %v1254 = vmul.f32 %v1190, %v1190
        %v1255 = vmul.f32 %v1191, %v1191
        %v1256 = vmul.f32 %v1192, %v1192
        %v1257 = vmul.f32 %v1193, %v1193
        %v1258 = vmul.f32 %v1194, %v1194
        %v1259 = vmul.f32 %v1195, %v1195
        %v1260 = vmul.f32 %v1196, %v1196
        %v1261 = vmul.f32 %v1197, %v1197
        %v1262 = vmul.f32 %v1198, %v1198
        %v1263 = vmul.f32 %v1199, %v1199
        %v1264 = vmul.f32 %v1200, %v1200
        %v1265 = vmul.f32 %v1201, %v1201
        %v1266 = vmul.f32 %v1202, %v1202
        %v1267 = vmul.f32 %v1203, %v1203
        %v1268 = vmul.f32 %v1204, %v1204
        %v1269 = vmul.f32 %v1205, %v1205
        %v1270 = vmul.f32 %v1206, %v1206
        %v1271 = vmul.f32 %v1207, %v1207
        %v1272 = vmul.f32 %v1208, %v1208
        %v1273 = vmul.f32 %v1209, %v1209
        %v1274 = vmul.f32 %v1210, %v1210
        %v1275 = vmul.f32 %v1211, %v1211
        %v1276 = vmul.f32 %v1212, %v1212
        %v1277 = vsub.f32 %v1213, %v1245
        %v1278 = vsub.f32 %v1214, %v1246
        %v1279 = vsub.f32 %v1215, %v1247
        %v1280 = vsub.f32 %v1216, %v1248
        %v1281 = vsub.f32 %v1217, %v1249
        %v1282 = vsub.f32 %v1218, %v1250
        %v1283 = vsub.f32 %v1219, %v1251
        %v1284 = vsub.f32 %v1220, %v1252
        %v1285 = vsub.f32 %v1221, %v1253
        %v1286 = vsub.f32 %v1222, %v1254
        %v1287 = vsub.f32 %v1223, %v1255
        %v1288 = vsub.f32 %v1224, %v1256
        %v1289 = vsub.f32 %v1225, %v1257
        %v1290 = vsub.f32 %v1226, %v1258
        %v1291 = vsub.f32 %v1227, %v1259
        %v1292 = vsub.f32 %v1228, %v1260
        %v1293 = vsub.f32 %v1229, %v1261
        %v1294 = vsub.f32 %v1230, %v1262
        %v1295 = vsub.f32 %v1231, %v1263
        %v1296 = vsub.f32 %v1232, %v1264
        %v1297 = vsub.f32 %v1233, %v1265
        %v1298 = vsub.f32 %v1234, %v1266
        %v1299 = vsub.f32 %v1235, %v1267
        %v1300 = vsub.f32 %v1236, %v1268
        %v1301 = vsub.f32 %v1237, %v1269
        %v1302 = vsub.f32 %v1238, %v1270
        %v1303 = vsub.f32 %v1239, %v1271
        %v1304 = vsub.f32 %v1240, %v1272
        %v1305 = vsub.f32 %v1241, %v1273
        %v1306 = vsub.f32 %v1242, %v1274
        %v1307 = vsub.f32 %v1243, %v1275
        %v1308 = vsub.f32 %v1244, %v1276
        %v1309 = vmax.f32 %v1277, 0.0
        %v1310 = vmax.f32 %v1278, 0.0
        %v1311 = vmax.f32 %v1279, 0.0
        %v1312 = vmax.f32 %v1280, 0.0
        %v1313 = vmax.f32 %v1281, 0.0
        %v1314 = vmax.f32 %v1282, 0.0
        %v1315 = vmax.f32 %v1283, 0.0
        %v1316 = vmax.f32 %v1284, 0.0
        %v1317 = vmax.f32 %v1285, 0.0
        %v1318 = vmax.f32 %v1286, 0.0
        %v1319 = vmax.f32 %v1287, 0.0
        %v1320 = vmax.f32 %v1288, 0.0
        %v1321 = vmax.f32 %v1289, 0.0
        %v1322 = vmax.f32 %v1290, 0.0
        %v1323 = vmax.f32 %v1291, 0.0
        %v1324 = vmax.f32 %v1292, 0.0
        %v1325 = vmax.f32 %v1293, 0.0
        %v1326 = vmax.f32 %v1294, 0.0
        %v1327 = vmax.f32 %v1295, 0.0
        %v1328 = vmax.f32 %v1296, 0.0
        %v1329 = vmax.f32 %v1297, 0.0
        %v1330 = vmax.f32 %v1298, 0.0
        %v1331 = vmax.f32 %v1299, 0.0
        %v1332 = vmax.f32 %v1300, 0.0
        %v1333 = vmax.f32 %v1301, 0.0
        %v1334 = vmax.f32 %v1302, 0.0
        %v1335 = vmax.f32 %v1303, 0.0
        %v1336 = vmax.f32 %v1304, 0.0
        %v1337 = vmax.f32 %v1305, 0.0
        %v1338 = vmax.f32 %v1306, 0.0
        %v1339 = vmax.f32 %v1307, 0.0
        %v1340 = vmax.f32 %v1308, 0.0
        %v1341 = vsub.f32 %v989, %v1181
        %v1342 = vsub.f32 %v990, %v1182
        %v1343 = vsub.f32 %v991, %v1183
        %v1344 = vsub.f32 %v992, %v1184
        %v1345 = vsub.f32 %v993, %v1185
        %v1346 = vsub.f32 %v994, %v1186
        %v1347 = vsub.f32 %v995, %v1187
        %v1348 = vsub.f32 %v996, %v1188
        %v1349 = vsub.f32 %v997, %v1189
        %v1350 = vsub.f32 %v998, %v1190
        %v1351 = vsub.f32 %v999, %v1191
        %v1352 = vsub.f32 %v1000, %v1192
        %v1353 = vsub.f32 %v1001, %v1193
        %v1354 = vsub.f32 %v1002, %v1194
        %v1355 = vsub.f32 %v1003, %v1195
        %v1356 = vsub.f32 %v1004, %v1196
        %v1357 = vsub.f32 %v1005, %v1197
        %v1358 = vsub.f32 %v1006, %v1198
        %v1359 = vsub.f32 %v1007, %v1199
        %v1360 = vsub.f32 %v1008, %v1200
        %v1361 = vsub.f32 %v1009, %v1201
        %v1362 = vsub.f32 %v1010, %v1202
        %v1363 = vsub.f32 %v1011, %v1203
        %v1364 = vsub.f32 %v1012, %v1204
        %v1365 = vsub.f32 %v1013, %v1205
        %v1366 = vsub.f32 %v1014, %v1206
        %v1367 = vsub.f32 %v1015, %v1207
        %v1368 = vsub.f32 %v1016, %v1208
        %v1369 = vsub.f32 %v1017, %v1209
        %v1370 = vsub.f32 %v1018, %v1210
        %v1371 = vsub.f32 %v1019, %v1211
        %v1372 = vsub.f32 %v1020, %v1212
        %v1373 = vadd.f32 %v1309, 1e-05
        %v1374 = vadd.f32 %v1310, 1e-05
        %v1375 = vadd.f32 %v1311, 1e-05
        %v1376 = vadd.f32 %v1312, 1e-05
        %v1377 = vadd.f32 %v1313, 1e-05
        %v1378 = vadd.f32 %v1314, 1e-05
        %v1379 = vadd.f32 %v1315, 1e-05
        %v1380 = vadd.f32 %v1316, 1e-05
        %v1381 = vadd.f32 %v1317, 1e-05
        %v1382 = vadd.f32 %v1318, 1e-05
        %v1383 = vadd.f32 %v1319, 1e-05
        %v1384 = vadd.f32 %v1320, 1e-05
        %v1385 = vadd.f32 %v1321, 1e-05
        %v1386 = vadd.f32 %v1322, 1e-05
        %v1387 = vadd.f32 %v1323, 1e-05
        %v1388 = vadd.f32 %v1324, 1e-05
        %v1389 = vadd.f32 %v1325, 1e-05
        %v1390 = vadd.f32 %v1326, 1e-05
        %v1391 = vadd.f32 %v1327, 1e-05
        %v1392 = vadd.f32 %v1328, 1e-05
        %v1393 = vadd.f32 %v1329, 1e-05
        %v1394 = vadd.f32 %v1330, 1e-05
        %v1395 = vadd.f32 %v1331, 1e-05
        %v1396 = vadd.f32 %v1332, 1e-05
        %v1397 = vadd.f32 %v1333, 1e-05
        %v1398 = vadd.f32 %v1334, 1e-05
        %v1399 = vadd.f32 %v1335, 1e-05
        %v1400 = vadd.f32 %v1336, 1e-05
        %v1401 = vadd.f32 %v1337, 1e-05
        %v1402 = vadd.f32 %v1338, 1e-05
        %v1403 = vadd.f32 %v1339, 1e-05
        %v1404 = vadd.f32 %v1340, 1e-05
        %v1405 = vrsqrt.pop %v1373
        %v1406 = vrsqrt.pop %v1374
        %v1407 = vrsqrt.pop %v1375
        %v1408 = vrsqrt.pop %v1376
        %v1409 = vrsqrt.pop %v1377
        %v1410 = vrsqrt.pop %v1378
        %v1411 = vrsqrt.pop %v1379
        %v1412 = vrsqrt.pop %v1380
        %v1413 = vrsqrt.pop %v1381
        %v1414 = vrsqrt.pop %v1382
        %v1415 = vrsqrt.pop %v1383
        %v1416 = vrsqrt.pop %v1384
        %v1417 = vrsqrt.pop %v1385
        %v1418 = vrsqrt.pop %v1386
        %v1419 = vrsqrt.pop %v1387
        %v1420 = vrsqrt.pop %v1388
        %v1421 = vrsqrt.pop %v1389
        %v1422 = vrsqrt.pop %v1390
        %v1423 = vrsqrt.pop %v1391
        %v1424 = vrsqrt.pop %v1392
        %v1425 = vrsqrt.pop %v1393
        %v1426 = vrsqrt.pop %v1394
        %v1427 = vrsqrt.pop %v1395
        %v1428 = vrsqrt.pop %v1396
        %v1429 = vrsqrt.pop %v1397
        %v1430 = vrsqrt.pop %v1398
        %v1431 = vrsqrt.pop %v1399
        %v1432 = vrsqrt.pop %v1400
        %v1433 = vrsqrt.pop %v1401
        %v1434 = vrsqrt.pop %v1402
        %v1435 = vrsqrt.pop %v1403
        %v1436 = vrsqrt.pop %v1404
        %v1437 = vmul.f32 %v1341, %v1405
        %v1438 = vmul.f32 %v1342, %v1406
        %v1439 = vmul.f32 %v1343, %v1407
        %v1440 = vmul.f32 %v1344, %v1408
        %v1441 = vmul.f32 %v1345, %v1409
        %v1442 = vmul.f32 %v1346, %v1410
        %v1443 = vmul.f32 %v1347, %v1411
        %v1444 = vmul.f32 %v1348, %v1412
        %v1445 = vmul.f32 %v1349, %v1413
        %v1446 = vmul.f32 %v1350, %v1414
        %v1447 = vmul.f32 %v1351, %v1415
        %v1448 = vmul.f32 %v1352, %v1416
        %v1449 = vmul.f32 %v1353, %v1417
        %v1450 = vmul.f32 %v1354, %v1418
        %v1451 = vmul.f32 %v1355, %v1419
        %v1452 = vmul.f32 %v1356, %v1420
        %v1453 = vmul.f32 %v1357, %v1421
        %v1454 = vmul.f32 %v1358, %v1422
        %v1455 = vmul.f32 %v1359, %v1423
        %v1456 = vmul.f32 %v1360, %v1424
        %v1457 = vmul.f32 %v1361, %v1425
        %v1458 = vmul.f32 %v1362, %v1426
        %v1459 = vmul.f32 %v1363, %v1427
        %v1460 = vmul.f32 %v1364, %v1428
        %v1461 = vmul.f32 %v1365, %v1429
        %v1462 = vmul.f32 %v1366, %v1430
        %v1463 = vmul.f32 %v1367, %v1431
        %v1464 = vmul.f32 %v1368, %v1432
        %v1465 = vmul.f32 %v1369, %v1433
        %v1466 = vmul.f32 %v1370, %v1434
        %v1467 = vmul.f32 %v1371, %v1435
        %v1468 = vmul.f32 %v1372, %v1436
        %v1469 = vld [vmem:[%s5] sm:$0x1]
        %v1471 = vlaneseq
        %v1472 = vshrl.u32 %v1471, 7
        %v1473 = vsub.s32 0, %v1472
        %v1474 = vrot.slane %v1469, %v1473
        %v1476 = vmul.f32 %v1437, %v1474
        %v1477 = vmul.f32 %v1438, %v1474
        %v1478 = vmul.f32 %v1439, %v1474
        %v1479 = vmul.f32 %v1440, %v1474
        %v1480 = vmul.f32 %v1441, %v1474
        %v1481 = vmul.f32 %v1442, %v1474
        %v1482 = vmul.f32 %v1443, %v1474
        %v1483 = vmul.f32 %v1444, %v1474
        %v1484 = vmul.f32 %v1445, %v1474
        %v1485 = vmul.f32 %v1446, %v1474
        %v1486 = vmul.f32 %v1447, %v1474
        %v1487 = vmul.f32 %v1448, %v1474
        %v1488 = vmul.f32 %v1449, %v1474
        %v1489 = vmul.f32 %v1450, %v1474
        %v1490 = vmul.f32 %v1451, %v1474
        %v1491 = vmul.f32 %v1452, %v1474
        %v1492 = vmul.f32 %v1453, %v1474
        %v1493 = vmul.f32 %v1454, %v1474
        %v1494 = vmul.f32 %v1455, %v1474
        %v1495 = vmul.f32 %v1456, %v1474
        %v1496 = vmul.f32 %v1457, %v1474
        %v1497 = vmul.f32 %v1458, %v1474
        %v1498 = vmul.f32 %v1459, %v1474
        %v1499 = vmul.f32 %v1460, %v1474
        %v1500 = vmul.f32 %v1461, %v1474
        %v1501 = vmul.f32 %v1462, %v1474
        %v1502 = vmul.f32 %v1463, %v1474
        %v1503 = vmul.f32 %v1464, %v1474
        %v1504 = vmul.f32 %v1465, %v1474
        %v1505 = vmul.f32 %v1466, %v1474
        %v1506 = vmul.f32 %v1467, %v1474
        %v1507 = vmul.f32 %v1468, %v1474
        %v1508 = vld [vmem:[%s6] sm:$0x1]
        %v1510 = vlaneseq
        %v1511 = vshrl.u32 %v1510, 7
        %v1512 = vsub.s32 0, %v1511
        %v1513 = vrot.slane %v1508, %v1512
        %v1515 = vadd.f32 %v1476, %v1513
        %v1516 = vadd.f32 %v1477, %v1513
        %v1517 = vadd.f32 %v1478, %v1513
        %v1518 = vadd.f32 %v1479, %v1513
        %v1519 = vadd.f32 %v1480, %v1513
        %v1520 = vadd.f32 %v1481, %v1513
        %v1521 = vadd.f32 %v1482, %v1513
        %v1522 = vadd.f32 %v1483, %v1513
        %v1523 = vadd.f32 %v1484, %v1513
        %v1524 = vadd.f32 %v1485, %v1513
        %v1525 = vadd.f32 %v1486, %v1513
        %v1526 = vadd.f32 %v1487, %v1513
        %v1527 = vadd.f32 %v1488, %v1513
        %v1528 = vadd.f32 %v1489, %v1513
        %v1529 = vadd.f32 %v1490, %v1513
        %v1530 = vadd.f32 %v1491, %v1513
        %v1531 = vadd.f32 %v1492, %v1513
        %v1532 = vadd.f32 %v1493, %v1513
        %v1533 = vadd.f32 %v1494, %v1513
        %v1534 = vadd.f32 %v1495, %v1513
        %v1535 = vadd.f32 %v1496, %v1513
        %v1536 = vadd.f32 %v1497, %v1513
        %v1537 = vadd.f32 %v1498, %v1513
        %v1538 = vadd.f32 %v1499, %v1513
        %v1539 = vadd.f32 %v1500, %v1513
        %v1540 = vadd.f32 %v1501, %v1513
        %v1541 = vadd.f32 %v1502, %v1513
        %v1542 = vadd.f32 %v1503, %v1513
        %v1543 = vadd.f32 %v1504, %v1513
        %v1544 = vadd.f32 %v1505, %v1513
        %v1545 = vadd.f32 %v1506, %v1513
        %v1546 = vadd.f32 %v1507, %v1513
        %1547 = vst [vmem:[%s325] sm:$0xff] %v1515
        %1548 = vst [vmem:[%s325 + $0x8] sm:$0xff] %v1516
        %1549 = vst [vmem:[%s325 + $0x10] sm:$0xff] %v1517
        %1550 = vst [vmem:[%s325 + $0x18] sm:$0xff] %v1518
        %1551 = vst [vmem:[%s325 + $0x20] sm:$0xff] %v1519
        %1552 = vst [vmem:[%s325 + $0x28] sm:$0xff] %v1520
        %1553 = vst [vmem:[%s325 + $0x30] sm:$0xff] %v1521
        %1554 = vst [vmem:[%s325 + $0x38] sm:$0xff] %v1522
        %1555 = vst [vmem:[%s325 + $0x40] sm:$0xff] %v1523
        %1556 = vst [vmem:[%s325 + $0x48] sm:$0xff] %v1524
        %1557 = vst [vmem:[%s325 + $0x50] sm:$0xff] %v1525
        %1558 = vst [vmem:[%s325 + $0x58] sm:$0xff] %v1526
        %1559 = vst [vmem:[%s325 + $0x60] sm:$0xff] %v1527
        %1560 = vst [vmem:[%s325 + $0x68] sm:$0xff] %v1528
        %1561 = vst [vmem:[%s325 + $0x70] sm:$0xff] %v1529
        %1562 = vst [vmem:[%s325 + $0x78] sm:$0xff] %v1530
        %1563 = vst [vmem:[%s325 + $0x80] sm:$0xff] %v1531
        %1564 = vst [vmem:[%s325 + $0x88] sm:$0xff] %v1532
        %1565 = vst [vmem:[%s325 + $0x90] sm:$0xff] %v1533
        %1566 = vst [vmem:[%s325 + $0x98] sm:$0xff] %v1534
        %1567 = vst [vmem:[%s325 + $0xa0] sm:$0xff] %v1535
        %1568 = vst [vmem:[%s325 + $0xa8] sm:$0xff] %v1536
        %1569 = vst [vmem:[%s325 + $0xb0] sm:$0xff] %v1537
        %1570 = vst [vmem:[%s325 + $0xb8] sm:$0xff] %v1538
        %1571 = vst [vmem:[%s325 + $0xc0] sm:$0xff] %v1539
        %1572 = vst [vmem:[%s325 + $0xc8] sm:$0xff] %v1540
        %1573 = vst [vmem:[%s325 + $0xd0] sm:$0xff] %v1541
        %1574 = vst [vmem:[%s325 + $0xd8] sm:$0xff] %v1542
        %1575 = vst [vmem:[%s325 + $0xe0] sm:$0xff] %v1543
        %1576 = vst [vmem:[%s325 + $0xe8] sm:$0xff] %v1544
        %1577 = vst [vmem:[%s325 + $0xf0] sm:$0xff] %v1545
        %1578 = vst [vmem:[%s325 + $0xf8] sm:$0xff] %v1546
        %s1579 = sand.u32 %s185, 1
        %s1580 = scalar_lea.sflag [#allocation4], %s1579
        %s1581 = sand.u32 %s185, 1
        %s1582 = smul.addr %s1581, 256
        %s1583 = scalar_lea.vmem [#allocation8], %s1582
        // Predicated region
        $region61: #{tpu_custom_call.1} parent=47 // pred_check
          %p1584 = pneg %p195
        $region62: #{tpu_custom_call.1} parent=47 // pred_check_branch
          %1586 = sbr.rel (%p1584) target = $region64
        $region63: #{tpu_custom_call.1} parent=47 // pred_region
          %s1587 = smul.u32 32, %s25
          %s1589 = ssub.s32 4096, 4096
          %1590 = vsyncadd %s1580, %s1589
          %s1591 = smul.addr %s1587, 128
          %s1592 = scalar_lea.hbm %s7, %s1591
          %s1593 = sshll.u32 %s1583, 4
          %s1594 = int_to_ptr.vmem [resolvable:$true] %s1593
          %1599 = dma.vmem_to_hbm [thread:$0]  %s1594, 4096, %s1592, %s1580, 128, 128, 8
        $region64: #{tpu_custom_call.1} parent=47 // pred_fallthru
          _
      $region48: #{tpu_custom_call.1} parent=5 // pred_fallthru
        _
      %p1600 = scmp.le.s32.totalorder 2, %s20
      // Predicated region
      $region65: #{tpu_custom_call.1} parent=5 // pred_check
        %p1601 = pneg %p1600
      $region66: #{tpu_custom_call.1} parent=5 // pred_check_branch
        %1603 = sbr.rel (%p1601) target = $region68
      $region67: #{tpu_custom_call.1} parent=5 // pred_region
        %s1604 = ssub.s32 %s20, 2
        // Predicated region
        $region69: #{tpu_custom_call.1} parent=67 // pred_check
          %p1605 = pneg %p201
        $region70: #{tpu_custom_call.1} parent=67 // pred_check_branch
          %1607 = sbr.rel (%p1605) target = $region72
        $region71: #{tpu_custom_call.1} parent=67 // pred_region
          %s1608 = sand.u32 %s186, 1
          %s1609 = scalar_lea.sflag [#allocation4], %s1608
          %s1610 = sand.u32 %s186, 1
          %s1611 = smul.addr %s1610, 256
          %s1612 = scalar_lea.vmem [#allocation8], %s1611
          %1613 = dma.done %s1609, 4096
        $region72: #{tpu_custom_call.1} parent=67 // pred_fallthru
          _
      $region68: #{tpu_custom_call.1} parent=5 // pred_fallthru
        _
    $region6: #{tpu_custom_call.1} parent=1 // loop_footer
      %s24 = sadd.s32 1, %s20
    $region7: #{tpu_custom_call.1} parent=1 // loop_footer_branch
      %19 = sbr.rel target = $region3
    $region8: #{tpu_custom_call.1} parent=1 // loop_exit
      _
    %1614 = vsyncpa [#allocation3], 1
    %s1615 = scalar_lea.sflag [#allocation3], 1
    %1616 = vsyncpa %s1615, 1
    %1617 = vsyncpa [#allocation6], 1
    %1618 = vsyncpa [#allocation4], 1
    %s1619 = scalar_lea.sflag [#allocation4], 1
    %1620 = vsyncpa %s1619, 1

</llo_original>
